<compile_context>
chip_gen: v7x
topology: tpu7x:2x2x1
jax: 0.10.0
libtpu: 0.0.40
codegen_flags: <defaults>
</compile_context>

<pallas_src>
import functools

import jax
import jax.numpy as jnp
from jax.experimental import pallas as pl
from jax.experimental.pallas import tpu as pltpu


def _round_up(x, m):
    return ((x + m - 1) // m) * m


def _nbytes(shape, dtype):
    n = 1
    for d in shape:
        n *= d
    return n * jnp.dtype(dtype).itemsize


def _plan_vmem(n_pad, h_pad, g_pad, o_pad, tm):
    """Decide adj residency and the vmem limit from the chip's VMEM capacity."""
    try:
        info = pltpu.get_tpu_info()
        cap = int(getattr(info, "vmem_capacity_bytes", 64 * 1024 * 1024))
    except Exception:  # conservative default (v7x-sized)
        cap = 64 * 1024 * 1024
    budget = max(32 << 20, int(0.85 * cap))
    # Inputs conservatively counted double-buffered; scratch counted once.
    common = 2 * (_nbytes((g_pad, n_pad), jnp.bfloat16)        # pool
                  + _nbytes((n_pad, h_pad), jnp.float32)       # xemb residual
                  + _nbytes((g_pad, 1), jnp.float32)           # inv counts
                  + _nbytes((2 * h_pad, h_pad), jnp.bfloat16)  # stacked update W
                  + _nbytes((1, h_pad), jnp.float32)           # update bias
                  + _nbytes((h_pad, o_pad), jnp.float32)       # readout W
                  + _nbytes((1, o_pad), jnp.float32)           # readout bias
                  + _nbytes((1, g_pad, o_pad), jnp.float32))   # output block
    common += _nbytes((2, n_pad, h_pad), jnp.bfloat16)         # h ping/pong scratch
    resident_need = common + 2 * _nbytes((n_pad, n_pad), jnp.bfloat16)
    tiled_need = common + 2 * _nbytes((tm, n_pad), jnp.bfloat16)
    adj_resident = resident_need <= budget
    need = resident_need if adj_resident else tiled_need
    vmem_limit = min(budget, max(32 << 20, need + (8 << 20)))
    return adj_resident, int(vmem_limit)


# ---------------------------------------------------------------------------
# Fused kernel: all MP steps + per-step readout (embedding residual passed in)
# ---------------------------------------------------------------------------
def _fused_gnn_kernel(adj_ref, pool_ref, xemb_ref, inv_cnt_ref,
                      w_upd_ref, b_upd_ref, w_ro_ref, b_ro_ref,
                      out_ref,
                      h_buf,
                      *, tm, adj_resident):
    s = pl.program_id(0)                 # message-passing step     (arbitrary)
    r = pl.program_id(1)                 # destination-row tile     (arbitrary)
    n_row_tiles = pl.num_programs(1)
    row0 = pl.multiple_of(r * tm, tm)

    # One-time h0 initialization from the precomputed embedding.
    @pl.when(jnp.logical_and(s == 0, r == 0))
    def _():
        h_buf[0] = xemb_ref[...].astype(jnp.bfloat16)

    cur = s % 2                          # Jacobi update: read cur, write nxt
    nxt = (s + 1) % 2

    # --- message aggregation for this dst-row tile: [tm, N] @ [N, H] ---------
    if adj_resident:
        adj_rows = adj_ref[pl.ds(row0, tm), :]       # slice of VMEM-resident adj
    else:
        adj_rows = adj_ref[...]                      # streamed (tm, N) tile
    h_prev = h_buf[cur]                              # (N, H) bf16, no cast needed
    msg = jnp.dot(adj_rows, h_prev, preferred_element_type=jnp.float32)

    # --- node update: single stacked matmul [tm, 2H] @ [2H, H] ---------------
    h_rows = h_buf[cur, pl.ds(row0, tm), :]          # (tm, H) bf16
    hm = jnp.concatenate([h_rows, msg.astype(jnp.bfloat16)], axis=-1)  # bf16
    y = (jnp.dot(hm, w_upd_ref[...], preferred_element_type=jnp.float32)
         + xemb_ref[pl.ds(row0, tm), :]              # residual on initial embedding
         + b_upd_ref[...])
    h_new = jnp.maximum(y, 0.0)                      # f32 epilogue (v5e-safe)
    h_buf[nxt, pl.ds(row0, tm), :] = h_new.astype(jnp.bfloat16)

    # --- fused readout: single pool @ h_next matmul at the last row tile -----
    @pl.when(r == n_row_tiles - 1)
    def _():
        pooled = jnp.dot(pool_ref[...], h_buf[nxt],
                         preferred_element_type=jnp.float32)   # (G, H) sum-pool
        pooled = pooled * inv_cnt_ref[...]                     # exact f32 mean
        o = jnp.dot(pooled, w_ro_ref[...],
                    preferred_element_type=jnp.float32) + b_ro_ref[...]
        out_ref[0] = o.astype(out_ref.dtype)


def fused_gnn_forward(adj, pool, xemb, inv_cnt, w_upd, b_upd, w_ro, b_ro,
                      *, mp_steps, tm, adj_resident, vmem_limit_bytes):
    n_pad, h_pad = xemb.shape
    g_pad = pool.shape[0]
    o_pad = w_ro.shape[1]
    assert n_pad % tm == 0
    r_tiles = n_pad // tm
    const = lambda s, r: (0, 0)

    adj_spec = (pl.BlockSpec((n_pad, n_pad), const) if adj_resident
                else pl.BlockSpec((tm, n_pad), lambda s, r: (r, 0)))

    return pl.pallas_call(
        functools.partial(_fused_gnn_kernel, tm=tm, adj_resident=adj_resident),
        out_shape=jax.ShapeDtypeStruct((mp_steps, g_pad, o_pad), jnp.float32),
        grid_spec=pltpu.PrefetchScalarGridSpec(
            num_scalar_prefetch=0,
            grid=(mp_steps, r_tiles),
            in_specs=[
                adj_spec,                                   # adjacency (bf16)
                pl.BlockSpec((g_pad, n_pad), const),        # 0/1 pooling matrix (bf16)
                pl.BlockSpec((n_pad, h_pad), const),        # embedding residual (f32)
                pl.BlockSpec((g_pad, 1), const),            # inverse node counts (f32)
                pl.BlockSpec((2 * h_pad, h_pad), const),    # stacked update weight (bf16)
                pl.BlockSpec((1, h_pad), const),            # update bias
                pl.BlockSpec((h_pad, o_pad), const),        # readout weight
                pl.BlockSpec((1, o_pad), const),            # readout bias
            ],
            out_specs=pl.BlockSpec((1, g_pad, o_pad), lambda s, r: (s, 0, 0)),
            scratch_shapes=[
                pltpu.VMEM((2, n_pad, h_pad), jnp.bfloat16),  # h ping/pong (bf16)
            ],
        ),
        compiler_params=pltpu.CompilerParams(
            # steps are sequential; row tiles share the h scratch -> arbitrary
            dimension_semantics=("arbitrary", "arbitrary"),
            vmem_limit_bytes=vmem_limit_bytes,
        ),
    )(adj, pool, xemb, inv_cnt, w_upd, b_upd, w_ro, b_ro)


# ---------------------------------------------------------------------------
# Concrete GNN (the PyTorch base class is abstract; this instantiates a single
# "node" element with a linear embedding, a ReLU message-passing update and a
# mean-pool + linear graph readout, mirroring forward()/initialize()/step(),
# with all MP steps + readouts fused into one Pallas kernel).
# ---------------------------------------------------------------------------
class GNNPallas:
    LANE = 128
    SUBLANE = 8

    def __init__(self, mp_steps, in_dim, hidden, out_dim, key):
        assert mp_steps >= 1
        self.mp_steps = mp_steps
        self.in_dim, self.hidden, self.out_dim = in_dim, hidden, out_dim
        self.h_pad = _round_up(hidden, self.LANE)
        self.o_pad = _round_up(out_dim, self.LANE)

        ks = jax.random.split(key, 4)
        s = 0.1
        # Unpadded f32 parameters (also used by the pure-JAX reference).
        self.ref_params = {
            "node_embed_w": s * jax.random.normal(ks[0], (in_dim, hidden), jnp.float32),
            "node_embed_b": jnp.zeros((1, hidden), jnp.float32),
            "node_w_self": s * jax.random.normal(ks[1], (hidden, hidden), jnp.float32),
            "node_w_msg": s * jax.random.normal(ks[2], (hidden, hidden), jnp.float32),
            "node_update_b": jnp.zeros((1, hidden), jnp.float32),
            "graph_readout_w": s * jax.random.normal(ks[3], (hidden, out_dim), jnp.float32),
            "graph_readout_b": jnp.zeros((1, out_dim), jnp.float32),
        }
        rp = self.ref_params
        pad2 = lambda a, r, c: jnp.zeros((r, c), a.dtype).at[:a.shape[0], :a.shape[1]].set(a)
        # Lane-padded kernel parameters; w_self/w_msg stacked so that
        # concat([h, msg]) @ w_upd == h @ w_self + msg @ w_msg exactly.
        self.params = {
            "w_upd": jnp.concatenate(
                [pad2(rp["node_w_self"], self.h_pad, self.h_pad),
                 pad2(rp["node_w_msg"], self.h_pad, self.h_pad)],
                axis=0).astype(jnp.bfloat16),
            "b_upd": pad2(rp["node_update_b"], 1, self.h_pad),
            "w_ro": pad2(rp["graph_readout_w"], self.h_pad, self.o_pad),
            "b_ro": pad2(rp["graph_readout_b"], 1, self.o_pad),
        }
        # TODO(synk): the abstract base class carries an LSTM cell state
        #             ('node_lstm'); this concrete update_fn does not use one.

    # --- mirrors GNN.forward (initialize/step/readout fused in one kernel) ---
    def forward(self, batch, output_all_steps=True):
        edge_index = batch["edge_index"]
        node2graph = batch["batch"].astype(jnp.int32)
        num_nodes = batch["node_input"].shape[0]
        num_graphs = int(batch["num_graphs"])

        # Lane-dense node padding + row-tile choice (single tile for small N).
        n_pad = max(_round_up(num_nodes, self.LANE), self.LANE)
        if n_pad <= 256:
            tm = n_pad
        else:
            tm = 256 if n_pad % 256 == 0 else 128
        g_pad = _round_up(max(num_graphs, 1), self.SUBLANE)

        # Glue (not the hot path): densify graph structure.
        adj = jnp.zeros((n_pad, n_pad), jnp.float32)
        adj = adj.at[edge_index[1], edge_index[0]].add(1.0)     # dst <- src
        adj = adj.astype(jnp.bfloat16)                          # small counts exact

        counts = jnp.bincount(node2graph, length=g_pad).astype(jnp.float32)
        inv_cnt = (1.0 / jnp.maximum(counts, 1.0))[:, None]     # (G, 1) f32 mean
        n2g_pad = jnp.concatenate(
            [node2graph, jnp.full((n_pad - num_nodes,), -1, jnp.int32)])
        pool = (n2g_pad[None, :] == jnp.arange(g_pad, dtype=jnp.int32)[:, None]
                ).astype(jnp.bfloat16)                          # exact 0/1 bf16

        # Node embedding outside the kernel (plain XLA matmul), f32 residual.
        rp = self.ref_params
        emb = (batch["node_input"].astype(jnp.float32) @ rp["node_embed_w"]
               + rp["node_embed_b"])
        xemb = jnp.zeros((n_pad, self.h_pad), jnp.float32)
        xemb = xemb.at[:num_nodes, :self.hidden].set(emb)

        adj_resident, vmem_limit = _plan_vmem(
            n_pad, self.h_pad, g_pad, self.o_pad, tm)

        p = self.params
        out_steps = fused_gnn_forward(
            adj, pool, xemb, inv_cnt,
            p["w_upd"], p["b_upd"], p["w_ro"], p["b_ro"],
            mp_steps=self.mp_steps, tm=tm,
            adj_resident=adj_resident,
            vmem_limit_bytes=vmem_limit)                        # [S, G_pad, O_pad]

        outputs = {"graph": []}
        for step_i in range(self.mp_steps):
            if not output_all_steps and step_i + 1 != self.mp_steps:
                continue
            outputs["graph"].append(out_steps[step_i, :num_graphs, :self.out_dim])
        return outputs

    # --- pure-JAX f32 reference for self-checking ----------------------------
    def forward_reference(self, batch, output_all_steps=True):
        rp = self.ref_params
        x = batch["node_input"].astype(jnp.float32)
        edge_index = batch["edge_index"]
        node2graph = batch["batch"].astype(jnp.int32)
        n = x.shape[0]
        g = int(batch["num_graphs"])
        adj = jnp.zeros((n, n), jnp.float32).at[edge_index[1], edge_index[0]].add(1.0)
        sections = jnp.bincount(node2graph, length=g)
        pool = (node2graph[None, :] == jnp.arange(g)[:, None]).astype(jnp.float32)
        pool = pool / jnp.maximum(sections, 1)[:, None].astype(jnp.float32)

        emb = x @ rp["node_embed_w"] + rp["node_embed_b"]
        h, x_in = emb, emb
        outs = []
        for step_i in range(self.mp_steps):
            msg = adj @ h
            h = jax.nn.relu(h @ rp["node_w_self"] + msg @ rp["node_w_msg"]
                            + x_in + rp["node_update_b"])
            if output_all_steps or step_i + 1 == self.mp_steps:
                outs.append(pool @ h @ rp["graph_readout_w"] + rp["graph_readout_b"])
        return {"graph": outs}


# ---------------------------------------------------------------------------
if __name__ == "__main__":
    key = jax.random.PRNGKey(0)
    k_param, k_x = jax.random.split(key)

    IN_DIM, HIDDEN, OUT_DIM, MP_STEPS = 8, 32, 4, 3
    NUM_GRAPHS = 2
    NODES_PER_GRAPH = 80          # 160 nodes -> padded to 256 -> single row tile
    N = NUM_GRAPHS * NODES_PER_GRAPH

    # deterministic inputs: node features + a bidirectional ring per graph
    node_input = jax.random.normal(k_x, (N, IN_DIM), jnp.float32)
    src = jnp.arange(N, dtype=jnp.int32)
    base = (src // NODES_PER_GRAPH) * NODES_PER_GRAPH
    dst = base + (src - base + 1) % NODES_PER_GRAPH
    edge_index = jnp.concatenate(
        [jnp.stack([src, dst]), jnp.stack([dst, src])], axis=1)  # [2, 2N]
    node2graph = jnp.repeat(jnp.arange(NUM_GRAPHS, dtype=jnp.int32), NODES_PER_GRAPH)

    batch = {
        "node_input": node_input,
        "edge_index": edge_index,
        "batch": node2graph,
        "num_graphs": NUM_GRAPHS,
    }

    model = GNNPallas(MP_STEPS, IN_DIM, HIDDEN, OUT_DIM, k_param)
    outputs = model.forward(batch, output_all_steps=True)
    for o in outputs["graph"]:
        jax.block_until_ready(o)

    assert len(outputs["graph"]) == MP_STEPS
    assert outputs["graph"][0].shape == (NUM_GRAPHS, OUT_DIM)

    # Self-check against the pure-JAX f32 reference (kernel feeds bf16 into the
    # MXU with f32 accumulation -> loose tolerance).
    ref = model.forward_reference(batch, output_all_steps=True)
    max_err = 0.0
    for o, r in zip(outputs["graph"], ref["graph"]):
        max_err = max(max_err, float(jnp.max(jnp.abs(o - r))))
    assert max_err < 3e-2, f"mismatch vs reference: max_err={max_err}"

    print("KERNEL_OK")
</pallas_src>

<mosaic_0001>
module attributes {stable_mosaic.version = 11 : i64} {
  func.func @_fused_gnn_kernel(%arg0: i32, %arg1: i32, %arg2: memref<256x256xbf16, #tpu.memory_space<vmem>>, %arg3: memref<8x256xbf16, #tpu.memory_space<vmem>>, %arg4: memref<256x128xf32, #tpu.memory_space<vmem>>, %arg5: memref<8x1xf32, #tpu.memory_space<vmem>>, %arg6: memref<256x128xbf16, #tpu.memory_space<vmem>>, %arg7: memref<1x128xf32, #tpu.memory_space<vmem>>, %arg8: memref<128x128xf32, #tpu.memory_space<vmem>>, %arg9: memref<1x128xf32, #tpu.memory_space<vmem>>, %arg10: memref<1x8x128xf32, #tpu.memory_space<vmem>>, %arg11: memref<2x256x128xbf16, #tpu.memory_space<vmem>>) attributes {dimension_semantics = [#tpu.dimension_semantics<arbitrary>, #tpu.dimension_semantics<arbitrary>], iteration_bounds = array<i64: 3, 1>, scalar_prefetch = 0 : i64, scratch_operands = 1 : i64, tpu.core_type = #tpu.core_type<tc>, window_params = [{pipeline_mode = #tpu.pipeline_mode<synchronous>, transform_indices = @transform_0, window_bounds = array<i64: 256, 256>}, {pipeline_mode = #tpu.pipeline_mode<synchronous>, transform_indices = @transform_1, window_bounds = array<i64: 8, 256>}, {pipeline_mode = #tpu.pipeline_mode<synchronous>, transform_indices = @transform_2, window_bounds = array<i64: 256, 128>}, {pipeline_mode = #tpu.pipeline_mode<synchronous>, transform_indices = @transform_3, window_bounds = array<i64: 8, 1>}, {pipeline_mode = #tpu.pipeline_mode<synchronous>, transform_indices = @transform_4, window_bounds = array<i64: 256, 128>}, {pipeline_mode = #tpu.pipeline_mode<synchronous>, transform_indices = @transform_5, window_bounds = array<i64: 1, 128>}, {pipeline_mode = #tpu.pipeline_mode<synchronous>, transform_indices = @transform_6, window_bounds = array<i64: 128, 128>}, {pipeline_mode = #tpu.pipeline_mode<synchronous>, transform_indices = @transform_7, window_bounds = array<i64: 1, 128>}, {transform_indices = @transform_8, window_bounds = array<i64: 1, 8, 128>}]} {
    %c256_i32 = arith.constant 256 : i32
    %0 = arith.muli %arg1, %c256_i32 : i32
    %1 = tpu.assume_multiple %0, 256 : i32
    %c0_i32 = arith.constant 0 : i32
    %2 = arith.cmpi eq, %arg0, %c0_i32 : i32
    %c0_i32_0 = arith.constant 0 : i32
    %3 = arith.cmpi eq, %arg1, %c0_i32_0 : i32
    %4 = arith.andi %2, %3 : i1
    %5 = arith.extui %4 : i1 to i32
    %c0_i32_1 = arith.constant 0 : i32
    %6 = arith.cmpi ne, %5, %c0_i32_1 : i32
    scf.if %6 {
      %c0_26 = arith.constant 0 : index
      %c0_27 = arith.constant 0 : index
      %59 = vector.load %arg4[%c0_26, %c0_27] : memref<256x128xf32, #tpu.memory_space<vmem>>, vector<256x128xf32>
      %60 = arith.truncf %59 : vector<256x128xf32> to vector<256x128xbf16>
      %c0_28 = arith.constant 0 : index
      %c0_29 = arith.constant 0 : index
      %c0_30 = arith.constant 0 : index
      %61 = vector.load %arg11[%c0_28, %c0_29, %c0_30] : memref<2x256x128xbf16, #tpu.memory_space<vmem>>, vector<1x256x128xbf16>
      %62 = vector.shape_cast %61 : vector<1x256x128xbf16> to vector<256x128xbf16>
      %63 = vector.shape_cast %60 : vector<256x128xbf16> to vector<1x256x128xbf16>
      tpu.vector_store %arg11[%c0_28, %c0_29, %c0_30], %63 {strides = array<i32>} : memref<2x256x128xbf16, #tpu.memory_space<vmem>>, vector<1x256x128xbf16>,
    } else {
    }
    %c2_i32 = arith.constant 2 : i32
    %c0_i32_2 = arith.constant 0 : i32
    %7 = arith.cmpi eq, %c2_i32, %c0_i32_2 : i32
    %c1_i32 = arith.constant 1 : i32
    %8 = arith.select %7, %c1_i32, %c2_i32 : i32
    %9 = arith.remsi %arg0, %8 : i32
    %c0_i32_3 = arith.constant 0 : i32
    %10 = arith.cmpi ne, %9, %c0_i32_3 : i32
    %c0_i32_4 = arith.constant 0 : i32
    %11 = arith.cmpi slt, %9, %c0_i32_4 : i32
    %c0_i32_5 = arith.constant 0 : i32
    %12 = arith.cmpi slt, %8, %c0_i32_5 : i32
    %13 = arith.xori %11, %12 : i1
    %14 = arith.andi %13, %10 : i1
    %15 = arith.addi %9, %8 : i32
    %16 = arith.select %14, %15, %9 : i32
    %c1_i32_6 = arith.constant 1 : i32
    %17 = arith.addi %arg0, %c1_i32_6 : i32
    %c2_i32_7 = arith.constant 2 : i32
    %c0_i32_8 = arith.constant 0 : i32
    %18 = arith.cmpi eq, %c2_i32_7, %c0_i32_8 : i32
    %c1_i32_9 = arith.constant 1 : i32
    %19 = arith.select %18, %c1_i32_9, %c2_i32_7 : i32
    %20 = arith.remsi %17, %19 : i32
    %c0_i32_10 = arith.constant 0 : i32
    %21 = arith.cmpi ne, %20, %c0_i32_10 : i32
    %c0_i32_11 = arith.constant 0 : i32
    %22 = arith.cmpi slt, %20, %c0_i32_11 : i32
    %c0_i32_12 = arith.constant 0 : i32
    %23 = arith.cmpi slt, %19, %c0_i32_12 : i32
    %24 = arith.xori %22, %23 : i1
    %25 = arith.andi %24, %21 : i1
    %26 = arith.addi %20, %19 : i32
    %27 = arith.select %25, %26, %20 : i32
    %28 = arith.index_cast %1 : i32 to index
    %c0 = arith.constant 0 : index
    %29 = vector.load %arg2[%28, %c0] : memref<256x256xbf16, #tpu.memory_space<vmem>>, vector<256x256xbf16>
    %30 = arith.index_cast %16 : i32 to index
    %c0_13 = arith.constant 0 : index
    %c0_14 = arith.constant 0 : index
    %31 = vector.load %arg11[%30, %c0_13, %c0_14] : memref<2x256x128xbf16, #tpu.memory_space<vmem>>, vector<1x256x128xbf16>
    %32 = vector.shape_cast %31 : vector<1x256x128xbf16> to vector<256x128xbf16>
    %cst = arith.constant dense<0.000000e+00> : vector<256x128xf32>
    %33 = tpu.matmul %29, %32, %cst {dimension_numbers = #tpu.dot_dimension_numbers<[1], [0], [0], [1], [0, 0, 1, 1], [], []>} : vector<256x256xbf16>, vector<256x128xbf16>, vector<256x128xf32> -> vector<256x128xf32>
    %34 = arith.index_cast %16 : i32 to index
    %35 = arith.index_cast %1 : i32 to index
    %c0_15 = arith.constant 0 : index
    %36 = vector.load %arg11[%34, %35, %c0_15] : memref<2x256x128xbf16, #tpu.memory_space<vmem>>, vector<1x256x128xbf16>
    %37 = vector.shape_cast %36 : vector<1x256x128xbf16> to vector<256x128xbf16>
    %38 = arith.truncf %33 : vector<256x128xf32> to vector<256x128xbf16>
    %39 = tpu.concatenate %37, %38 in 1 : vector<256x128xbf16>, vector<256x128xbf16> -> vector<256x256xbf16>
    %c0_16 = arith.constant 0 : index
    %c0_17 = arith.constant 0 : index
    %40 = vector.load %arg6[%c0_16, %c0_17] : memref<256x128xbf16, #tpu.memory_space<vmem>>, vector<256x128xbf16>
    %cst_18 = arith.constant dense<0.000000e+00> : vector<256x128xf32>
    %41 = tpu.matmul %39, %40, %cst_18 {dimension_numbers = #tpu.dot_dimension_numbers<[1], [0], [0], [1], [0, 0, 1, 1], [], []>} : vector<256x256xbf16>, vector<256x128xbf16>, vector<256x128xf32> -> vector<256x128xf32>
    %42 = arith.index_cast %1 : i32 to index
    %c0_19 = arith.constant 0 : index
    %43 = vector.load %arg4[%42, %c0_19] : memref<256x128xf32, #tpu.memory_space<vmem>>, vector<256x128xf32>
    %44 = arith.addf %41, %43 : vector<256x128xf32>
    %c0_20 = arith.constant 0 : index
    %c0_21 = arith.constant 0 : index
    %45 = vector.load %arg7[%c0_20, %c0_21] : memref<1x128xf32, #tpu.memory_space<vmem>>, vector<1x128xf32>
    %46 = vector.broadcast %45 : vector<1x128xf32> to vector<256x128xf32>
    %47 = arith.addf %44, %46 : vector<256x128xf32>
    %cst_22 = arith.constant 0.000000e+00 : f32
    %48 = vector.broadcast %cst_22 : f32 to vector<256x128xf32>
    %49 = arith.maximumf %47, %48 : vector<256x128xf32>
    %50 = arith.truncf %49 : vector<256x128xf32> to vector<256x128xbf16>
    %51 = arith.index_cast %27 : i32 to index
    %52 = arith.index_cast %1 : i32 to index
    %c0_23 = arith.constant 0 : index
    %53 = vector.load %arg11[%51, %52, %c0_23] : memref<2x256x128xbf16, #tpu.memory_space<vmem>>, vector<1x256x128xbf16>
    %54 = vector.shape_cast %53 : vector<1x256x128xbf16> to vector<256x128xbf16>
    %55 = vector.shape_cast %50 : vector<256x128xbf16> to vector<1x256x128xbf16>
    tpu.vector_store %arg11[%51, %52, %c0_23], %55 {strides = array<i32>} : memref<2x256x128xbf16, #tpu.memory_space<vmem>>, vector<1x256x128xbf16>,
    %c0_i32_24 = arith.constant 0 : i32
    %56 = arith.cmpi eq, %arg1, %c0_i32_24 : i32
    %57 = arith.extui %56 : i1 to i32
    %c0_i32_25 = arith.constant 0 : i32
    %58 = arith.cmpi ne, %57, %c0_i32_25 : i32
    scf.if %58 {
      %c0_26 = arith.constant 0 : index
      %c0_27 = arith.constant 0 : index
      %59 = vector.load %arg3[%c0_26, %c0_27] : memref<8x256xbf16, #tpu.memory_space<vmem>>, vector<8x256xbf16>
      %60 = arith.index_cast %27 : i32 to index
      %c0_28 = arith.constant 0 : index
      %c0_29 = arith.constant 0 : index
      %61 = vector.load %arg11[%60, %c0_28, %c0_29] : memref<2x256x128xbf16, #tpu.memory_space<vmem>>, vector<1x256x128xbf16>
      %62 = vector.shape_cast %61 : vector<1x256x128xbf16> to vector<256x128xbf16>
      %cst_30 = arith.constant dense<0.000000e+00> : vector<8x128xf32>
      %63 = tpu.matmul %59, %62, %cst_30 {dimension_numbers = #tpu.dot_dimension_numbers<[1], [0], [0], [1], [0, 0, 1, 1], [], []>} : vector<8x256xbf16>, vector<256x128xbf16>, vector<8x128xf32> -> vector<8x128xf32>
      %c0_31 = arith.constant 0 : index
      %c0_32 = arith.constant 0 : index
      %64 = vector.load %arg5[%c0_31, %c0_32] : memref<8x1xf32, #tpu.memory_space<vmem>>, vector<8x1xf32>
      %65 = vector.broadcast %64 : vector<8x1xf32> to vector<8x128xf32>
      %66 = arith.mulf %63, %65 : vector<8x128xf32>
      %c0_33 = arith.constant 0 : index
      %c0_34 = arith.constant 0 : index
      %67 = vector.load %arg8[%c0_33, %c0_34] : memref<128x128xf32, #tpu.memory_space<vmem>>, vector<128x128xf32>
      %cst_35 = arith.constant dense<0.000000e+00> : vector<8x128xf32>
      %68 = tpu.matmul %66, %67, %cst_35 {dimension_numbers = #tpu.dot_dimension_numbers<[1], [0], [0], [1], [0, 0, 1, 1], [], []>} : vector<8x128xf32>, vector<128x128xf32>, vector<8x128xf32> -> vector<8x128xf32>
      %c0_36 = arith.constant 0 : index
      %c0_37 = arith.constant 0 : index
      %69 = vector.load %arg9[%c0_36, %c0_37] : memref<1x128xf32, #tpu.memory_space<vmem>>, vector<1x128xf32>
      %70 = vector.broadcast %69 : vector<1x128xf32> to vector<8x128xf32>
      %71 = arith.addf %68, %70 : vector<8x128xf32>
      %c0_38 = arith.constant 0 : index
      %c0_39 = arith.constant 0 : index
      %c0_40 = arith.constant 0 : index
      %72 = vector.load %arg10[%c0_38, %c0_39, %c0_40] : memref<1x8x128xf32, #tpu.memory_space<vmem>>, vector<1x8x128xf32>
      %73 = vector.shape_cast %72 : vector<1x8x128xf32> to vector<8x128xf32>
      %74 = vector.shape_cast %71 : vector<8x128xf32> to vector<1x8x128xf32>
      tpu.vector_store %arg10[%c0_38, %c0_39, %c0_40], %74 {strides = array<i32>} : memref<1x8x128xf32, #tpu.memory_space<vmem>>, vector<1x8x128xf32>,
    } else {
    }
    return
  }
  func.func @transform_0(%arg0: i32, %arg1: i32) -> (i32, i32) {
    %c0_i32 = arith.constant 0 : i32
    %c0_i32_0 = arith.constant 0 : i32
    %c0_i32_1 = arith.constant 0 : i32
    return %c0_i32, %c0_i32_0 : i32, i32
  }
  func.func @transform_1(%arg0: i32, %arg1: i32) -> (i32, i32) {
    %c0_i32 = arith.constant 0 : i32
    %c0_i32_0 = arith.constant 0 : i32
    %c0_i32_1 = arith.constant 0 : i32
    return %c0_i32, %c0_i32_0 : i32, i32
  }
  func.func @transform_2(%arg0: i32, %arg1: i32) -> (i32, i32) {
    %c0_i32 = arith.constant 0 : i32
    %c0_i32_0 = arith.constant 0 : i32
    %c0_i32_1 = arith.constant 0 : i32
    return %c0_i32, %c0_i32_0 : i32, i32
  }
  func.func @transform_3(%arg0: i32, %arg1: i32) -> (i32, i32) {
    %c0_i32 = arith.constant 0 : i32
    %c0_i32_0 = arith.constant 0 : i32
    %c0_i32_1 = arith.constant 0 : i32
    return %c0_i32, %c0_i32_0 : i32, i32
  }
  func.func @transform_4(%arg0: i32, %arg1: i32) -> (i32, i32) {
    %c0_i32 = arith.constant 0 : i32
    %c0_i32_0 = arith.constant 0 : i32
    %c0_i32_1 = arith.constant 0 : i32
    return %c0_i32, %c0_i32_0 : i32, i32
  }
  func.func @transform_5(%arg0: i32, %arg1: i32) -> (i32, i32) {
    %c0_i32 = arith.constant 0 : i32
    %c0_i32_0 = arith.constant 0 : i32
    %c0_i32_1 = arith.constant 0 : i32
    return %c0_i32, %c0_i32_0 : i32, i32
  }
  func.func @transform_6(%arg0: i32, %arg1: i32) -> (i32, i32) {
    %c0_i32 = arith.constant 0 : i32
    %c0_i32_0 = arith.constant 0 : i32
    %c0_i32_1 = arith.constant 0 : i32
    return %c0_i32, %c0_i32_0 : i32, i32
  }
  func.func @transform_7(%arg0: i32, %arg1: i32) -> (i32, i32) {
    %c0_i32 = arith.constant 0 : i32
    %c0_i32_0 = arith.constant 0 : i32
    %c0_i32_1 = arith.constant 0 : i32
    return %c0_i32, %c0_i32_0 : i32, i32
  }
  func.func @transform_8(%arg0: i32, %arg1: i32) -> (i32, i32, i32) {
    %c0_i32 = arith.constant 0 : i32
    %c0_i32_0 = arith.constant 0 : i32
    %c0_i32_1 = arith.constant 0 : i32
    return %arg0, %c0_i32, %c0_i32_0 : i32, i32, i32
  }
}

</mosaic_0001>

<llo_original>
// kernel: tpu_custom_call.1
$region0: #{tpu_custom_call.1}
  #allocation0 [shape = 'u32[]', space=smem, size = 0x4, offset = 0x4, fixed_abs, tag = 'smem constant byte address 0x4 - core index']
  #allocation1 [shape = 'u32[144,128]{1,0:T(1,128)}', space=vmem, size = 0x12000, scoped, tag = 'internal scratch']
  #allocation2 [shape = 'bf16[2,256,128]{2,1,0:T(16,128)(2,1)}', space=vmem, size = 0x20000, scoped, tag = 'scratch operand']
  %s0 = inlined_call_operand.hbm [shape: bf16[256,256], index: 0, kind: input, shape index: {}]
  %s1 = inlined_call_operand.vmem [shape: bf16[8,256], index: 1, kind: input, shape index: {}]
  %s2 = inlined_call_operand.hbm [shape: f32[256,128], index: 2, kind: input, shape index: {}]
  %s3 = inlined_call_operand.vmem [shape: f32[8,1], index: 3, kind: input, shape index: {}]
  %s4 = inlined_call_operand.hbm [shape: bf16[256,128], index: 4, kind: input, shape index: {}]
  %s5 = inlined_call_operand.vmem [shape: f32[1,128], index: 5, kind: input, shape index: {}]
  %s6 = inlined_call_operand.hbm [shape: f32[128,128], index: 6, kind: input, shape index: {}]
  %s7 = inlined_call_operand.vmem [shape: f32[1,128], index: 7, kind: input, shape index: {}]
  %s8 = inlined_call_operand.hbm [shape: f32[3,8,128], index: 8, kind: output, shape index: {}]
  %s9 = sld [smem:[#allocation0]]
  $region89: #{tpu_custom_call.1} parent=0
    _
  %s11 = ssub.s32 1, %s9
  %s12 = scalar_select 0, %s11, %s9
  $region1: #{tpu_custom_call.1} parent=0
    #allocation3 [shape = 'u8[131072]{0}', space=vmem, size = 0x20000, scoped, tag = 'input window, operand 0, single buffered']
    #allocation4 [shape = 's32[2]{0}', space=sflag, size = 0x8, scoped, tag = 'scoped memory for tpu_custom_call.1']
    #allocation5 [shape = 's32[2]{0}', space=sflag, size = 0x8, scoped, tag = 'scoped memory for tpu_custom_call.1']
    #allocation6 [shape = 'u8[131072]{0}', space=vmem, size = 0x20000, scoped, tag = 'input window, operand 2, single buffered']
    #allocation7 [shape = 's32[1]{0}', space=sflag, size = 0x4, scoped, tag = 'scoped memory for tpu_custom_call.1']
    #allocation8 [shape = 'u8[65536]{0}', space=vmem, size = 0x10000, scoped, tag = 'input window, operand 4, single buffered']
    #allocation9 [shape = 'u8[65536]{0}', space=vmem, size = 0x10000, scoped, tag = 'input window, operand 6, single buffered']
    #allocation10 [shape = 's32[1]{0}', space=sflag, size = 0x4, scoped, tag = 'scoped memory for tpu_custom_call.1']
    #allocation11 [shape = 'u8[8192]{0}', space=vmem, size = 0x2000, scoped, tag = 'output window, operand 0']
    %13 = vsyncpa [#allocation4], 0
    %14 = vsyncpa [#allocation7], 0
    %15 = vsyncpa [#allocation10], 0
    %16 = vsyncpa [#allocation5], 0
    %s17 = scalar_lea.sflag [#allocation5], 1
    %18 = vsyncpa %s17, 0
    loop: start=0, step=1, limit=5
    $region2: #{tpu_custom_call.1} parent=1 // loop_pre_header
      _
    $region3: #{tpu_custom_call.1} parent=1 // loop_header
      %s20 = sphi 0, %s24
      %p21 = scmp.ge.s32.totalorder %s20, 5
      %s27 = sphi 0, %s39
      %s28 = sphi 0, %s35
      %s29 = sphi 0, %s27
      %s30 = sphi 0, %s28
      %s31 = sphi 0, %s29
      %s32 = sphi 0, %s30
      %s40 = sphi 0, %s40
      %s42 = sphi 0, %s40
      %s43 = sphi 0, %s42
      %s57 = sphi 0, %s43
      %s61 = sphi 0, %s61
      %s63 = sphi 0, %s61
      %s64 = sphi 0, %s63
      %s78 = sphi 0, %s64
      %s82 = sphi 0, %s82
      %s84 = sphi 0, %s82
      %s85 = sphi 0, %s84
      %s99 = sphi 0, %s85
      %s103 = sphi 0, %s103
      %s105 = sphi 0, %s103
      %s106 = sphi 0, %s105
      %s120 = sphi 0, %s106
      %s124 = sphi 0, %s124
      %s126 = sphi 0, %s124
      %s127 = sphi 0, %s126
      %s141 = sphi 0, %s127
      %s145 = sphi 0, %s145
      %s147 = sphi 0, %s145
      %s148 = sphi 0, %s147
      %s162 = sphi 0, %s148
      %s166 = sphi 0, %s166
      %s168 = sphi 0, %s166
      %s169 = sphi 0, %s168
      %s183 = sphi 0, %s169
      %s187 = sphi 0, %s187
      %s189 = sphi 0, %s187
      %s190 = sphi 0, %s189
      %s204 = sphi 0, %s190
      %s210 = sphi 0, %s212
      %s213 = sphi 0, %s210
      %s214 = sphi 0, %s213
      %s230 = sphi 0, %s214
    $region4: #{tpu_custom_call.1} parent=1 // loop_header_branch
      %23 = sbr.rel (%p21) target = $region8
    $region5: #{tpu_custom_call.1} parent=1 // loop_body
      %s25 = ssub.s32 %s20, 1
      %s26 = ssub.s32 %s20, 2
      %s33 = sadd.s32 1, %s28
      %p34 = scmp.ge.s32.totalorder %s33, 1
      %s35 = scalar_select %p34, 0, %s33
      %s36 = sadd.s32 1, %s27
      %s37 = scalar_select %p34, %s36, %s27
      %p38 = scmp.ge.s32.totalorder %s37, 3
      %s39 = scalar_select %p38, 0, %s37
      %s41 = sadd.s32 %s40, 1
      %p44 = scmp.eq.s32.totalorder %s20, 2
      %p45 = scmp.ne.s32.totalorder %s40, %s42
      %p46 = scmp.eq.s32.totalorder %s20, 0
      %p47 = por %p45, %p46
      %p48 = scmp.ne.s32.totalorder %s40, %s42
      %p49 = scmp.eq.s32.totalorder %s25, 2
      %p50 = por %p48, %p49
      %p51 = scmp.ne.s32.totalorder %s42, %s43
      %p52 = scmp.eq.s32.totalorder %s25, 0
      %p53 = por %p51, %p52
      %p54 = scmp.ne.s32.totalorder %s42, %s43
      %p55 = scmp.eq.s32.totalorder %s26, 2
      %p56 = por %p54, %p55
      %p58 = scmp.ne.s32.totalorder %s43, %s57
      %p59 = scmp.eq.s32.totalorder %s26, 0
      %p60 = por %p58, %p59
      %s62 = sadd.s32 %s61, 1
      %p65 = scmp.eq.s32.totalorder %s20, 2
      %p66 = scmp.ne.s32.totalorder %s61, %s63
      %p67 = scmp.eq.s32.totalorder %s20, 0
      %p68 = por %p66, %p67
      %p69 = scmp.ne.s32.totalorder %s61, %s63
      %p70 = scmp.eq.s32.totalorder %s25, 2
      %p71 = por %p69, %p70
      %p72 = scmp.ne.s32.totalorder %s63, %s64
      %p73 = scmp.eq.s32.totalorder %s25, 0
      %p74 = por %p72, %p73
      %p75 = scmp.ne.s32.totalorder %s63, %s64
      %p76 = scmp.eq.s32.totalorder %s26, 2
      %p77 = por %p75, %p76
      %p79 = scmp.ne.s32.totalorder %s64, %s78
      %p80 = scmp.eq.s32.totalorder %s26, 0
      %p81 = por %p79, %p80
      %s83 = sadd.s32 %s82, 1
      %p86 = scmp.eq.s32.totalorder %s20, 2
      %p87 = scmp.ne.s32.totalorder %s82, %s84
      %p88 = scmp.eq.s32.totalorder %s20, 0
      %p89 = por %p87, %p88
      %p90 = scmp.ne.s32.totalorder %s82, %s84
      %p91 = scmp.eq.s32.totalorder %s25, 2
      %p92 = por %p90, %p91
      %p93 = scmp.ne.s32.totalorder %s84, %s85
      %p94 = scmp.eq.s32.totalorder %s25, 0
      %p95 = por %p93, %p94
      %p96 = scmp.ne.s32.totalorder %s84, %s85
      %p97 = scmp.eq.s32.totalorder %s26, 2
      %p98 = por %p96, %p97
      %p100 = scmp.ne.s32.totalorder %s85, %s99
      %p101 = scmp.eq.s32.totalorder %s26, 0
      %p102 = por %p100, %p101
      %s104 = sadd.s32 %s103, 1
      %p107 = scmp.eq.s32.totalorder %s20, 2
      %p108 = scmp.ne.s32.totalorder %s103, %s105
      %p109 = scmp.eq.s32.totalorder %s20, 0
      %p110 = por %p108, %p109
      %p111 = scmp.ne.s32.totalorder %s103, %s105
      %p112 = scmp.eq.s32.totalorder %s25, 2
      %p113 = por %p111, %p112
      %p114 = scmp.ne.s32.totalorder %s105, %s106
      %p115 = scmp.eq.s32.totalorder %s25, 0
      %p116 = por %p114, %p115
      %p117 = scmp.ne.s32.totalorder %s105, %s106
      %p118 = scmp.eq.s32.totalorder %s26, 2
      %p119 = por %p117, %p118
      %p121 = scmp.ne.s32.totalorder %s106, %s120
      %p122 = scmp.eq.s32.totalorder %s26, 0
      %p123 = por %p121, %p122
      %s125 = sadd.s32 %s124, 1
      %p128 = scmp.eq.s32.totalorder %s20, 2
      %p129 = scmp.ne.s32.totalorder %s124, %s126
      %p130 = scmp.eq.s32.totalorder %s20, 0
      %p131 = por %p129, %p130
      %p132 = scmp.ne.s32.totalorder %s124, %s126
      %p133 = scmp.eq.s32.totalorder %s25, 2
      %p134 = por %p132, %p133
      %p135 = scmp.ne.s32.totalorder %s126, %s127
      %p136 = scmp.eq.s32.totalorder %s25, 0
      %p137 = por %p135, %p136
      %p138 = scmp.ne.s32.totalorder %s126, %s127
      %p139 = scmp.eq.s32.totalorder %s26, 2
      %p140 = por %p138, %p139
      %p142 = scmp.ne.s32.totalorder %s127, %s141
      %p143 = scmp.eq.s32.totalorder %s26, 0
      %p144 = por %p142, %p143
      %s146 = sadd.s32 %s145, 1
      %p149 = scmp.eq.s32.totalorder %s20, 2
      %p150 = scmp.ne.s32.totalorder %s145, %s147
      %p151 = scmp.eq.s32.totalorder %s20, 0
      %p152 = por %p150, %p151
      %p153 = scmp.ne.s32.totalorder %s145, %s147
      %p154 = scmp.eq.s32.totalorder %s25, 2
      %p155 = por %p153, %p154
      %p156 = scmp.ne.s32.totalorder %s147, %s148
      %p157 = scmp.eq.s32.totalorder %s25, 0
      %p158 = por %p156, %p157
      %p159 = scmp.ne.s32.totalorder %s147, %s148
      %p160 = scmp.eq.s32.totalorder %s26, 2
      %p161 = por %p159, %p160
      %p163 = scmp.ne.s32.totalorder %s148, %s162
      %p164 = scmp.eq.s32.totalorder %s26, 0
      %p165 = por %p163, %p164
      %s167 = sadd.s32 %s166, 1
      %p170 = scmp.eq.s32.totalorder %s20, 2
      %p171 = scmp.ne.s32.totalorder %s166, %s168
      %p172 = scmp.eq.s32.totalorder %s20, 0
      %p173 = por %p171, %p172
      %p174 = scmp.ne.s32.totalorder %s166, %s168
      %p175 = scmp.eq.s32.totalorder %s25, 2
      %p176 = por %p174, %p175
      %p177 = scmp.ne.s32.totalorder %s168, %s169
      %p178 = scmp.eq.s32.totalorder %s25, 0
      %p179 = por %p177, %p178
      %p180 = scmp.ne.s32.totalorder %s168, %s169
      %p181 = scmp.eq.s32.totalorder %s26, 2
      %p182 = por %p180, %p181
      %p184 = scmp.ne.s32.totalorder %s169, %s183
      %p185 = scmp.eq.s32.totalorder %s26, 0
      %p186 = por %p184, %p185
      %s188 = sadd.s32 %s187, 1
      %p191 = scmp.eq.s32.totalorder %s20, 2
      %p192 = scmp.ne.s32.totalorder %s187, %s189
      %p193 = scmp.eq.s32.totalorder %s20, 0
      %p194 = por %p192, %p193
      %p195 = scmp.ne.s32.totalorder %s187, %s189
      %p196 = scmp.eq.s32.totalorder %s25, 2
      %p197 = por %p195, %p196
      %p198 = scmp.ne.s32.totalorder %s189, %s190
      %p199 = scmp.eq.s32.totalorder %s25, 0
      %p200 = por %p198, %p199
      %p201 = scmp.ne.s32.totalorder %s189, %s190
      %p202 = scmp.eq.s32.totalorder %s26, 2
      %p203 = por %p201, %p202
      %p205 = scmp.ne.s32.totalorder %s190, %s204
      %p206 = scmp.eq.s32.totalorder %s26, 0
      %p207 = por %p205, %p206
      %s208 = ssub.s32 %s27, %s39
      %p209 = scmp.eq.s32.totalorder %s208, 0
      %s211 = sadd.s32 %s210, 1
      %s212 = scalar_select %p209, %s210, %s211
      %p215 = pneg %p209
      %p216 = scmp.eq.s32.totalorder %s20, 2
      %p217 = por %p215, %p216
      %p218 = scmp.ne.s32.totalorder %s210, %s213
      %p219 = scmp.eq.s32.totalorder %s20, 0
      %p220 = por %p218, %p219
      %p221 = scmp.ne.s32.totalorder %s210, %s213
      %p222 = scmp.eq.s32.totalorder %s25, 2
      %p223 = por %p221, %p222
      %p224 = scmp.ne.s32.totalorder %s213, %s214
      %p225 = scmp.eq.s32.totalorder %s25, 0
      %p226 = por %p224, %p225
      %p227 = scmp.ne.s32.totalorder %s213, %s214
      %p228 = scmp.eq.s32.totalorder %s26, 2
      %p229 = por %p227, %p228
      %p231 = scmp.ne.s32.totalorder %s214, %s230
      %p232 = scmp.eq.s32.totalorder %s26, 0
      %p233 = por %p231, %p232
      %p234 = scmp.le.s32.totalorder 1, %s20
      %p235 = scmp.lt.s32.totalorder %s20, 4
      %p236 = pnand %p234, %p235
      %p237 = pneg %p236
      // Predicated region
      $region9: #{tpu_custom_call.1} parent=5 // pred_check
        _
      $region10: #{tpu_custom_call.1} parent=5 // pred_check_branch
        %239 = sbr.rel (%p236) target = $region12
      $region11: #{tpu_custom_call.1} parent=5 // pred_region
        %s240 = ssub.s32 %s20, 1
        // Predicated region
        $region13: #{tpu_custom_call.1} parent=11 // pred_check
          %p241 = pneg %p53
        $region14: #{tpu_custom_call.1} parent=11 // pred_check_branch
          %243 = sbr.rel (%p241) target = $region16
        $region15: #{tpu_custom_call.1} parent=11 // pred_region
          %s245 = ssub.s32 4096, 4096
          %246 = vsyncadd [#allocation4], %s245
          %s247 = sshll.u32 [#allocation3], 4
          %s248 = int_to_ptr.vmem [resolvable:$true] %s247
          %253 = dma.hbm_to_vmem [thread:$0]  %s0, 4096, %s248, [#allocation4], 128, 128, 8
        $region16: #{tpu_custom_call.1} parent=11 // pred_fallthru
          _
        // Predicated region
        $region17: #{tpu_custom_call.1} parent=11 // pred_check
          %p254 = pneg %p74
        $region18: #{tpu_custom_call.1} parent=11 // pred_check_branch
          %256 = sbr.rel (%p254) target = $region20
        $region19: #{tpu_custom_call.1} parent=11 // pred_region
          _
        $region20: #{tpu_custom_call.1} parent=11 // pred_fallthru
          _
        // Predicated region
        $region21: #{tpu_custom_call.1} parent=11 // pred_check
          %p257 = pneg %p95
        $region22: #{tpu_custom_call.1} parent=11 // pred_check_branch
          %259 = sbr.rel (%p257) target = $region24
        $region23: #{tpu_custom_call.1} parent=11 // pred_region
          %s261 = ssub.s32 4096, 4096
          %262 = vsyncadd [#allocation7], %s261
          %s263 = sshll.u32 [#allocation6], 4
          %s264 = int_to_ptr.vmem [resolvable:$true] %s263
          %269 = dma.hbm_to_vmem [thread:$0]  %s2, 4096, %s264, [#allocation7], 128, 128, 8
        $region24: #{tpu_custom_call.1} parent=11 // pred_fallthru
          _
        // Predicated region
        $region25: #{tpu_custom_call.1} parent=11 // pred_check
          %p270 = pneg %p116
        $region26: #{tpu_custom_call.1} parent=11 // pred_check_branch
          %272 = sbr.rel (%p270) target = $region28
        $region27: #{tpu_custom_call.1} parent=11 // pred_region
          _
        $region28: #{tpu_custom_call.1} parent=11 // pred_fallthru
          _
        // Predicated region
        $region29: #{tpu_custom_call.1} parent=11 // pred_check
          %p273 = pneg %p137
        $region30: #{tpu_custom_call.1} parent=11 // pred_check_branch
          %275 = sbr.rel (%p273) target = $region32
        $region31: #{tpu_custom_call.1} parent=11 // pred_region
          %s277 = ssub.s32 2048, 2048
          %278 = vsyncadd [#allocation7], %s277
          %s279 = sshll.u32 [#allocation8], 4
          %s280 = int_to_ptr.vmem [resolvable:$true] %s279
          %285 = dma.hbm_to_vmem [thread:$0]  %s4, 2048, %s280, [#allocation7], 64, 64, 4
        $region32: #{tpu_custom_call.1} parent=11 // pred_fallthru
          _
        // Predicated region
        $region33: #{tpu_custom_call.1} parent=11 // pred_check
          %p286 = pneg %p158
        $region34: #{tpu_custom_call.1} parent=11 // pred_check_branch
          %288 = sbr.rel (%p286) target = $region36
        $region35: #{tpu_custom_call.1} parent=11 // pred_region
          _
        $region36: #{tpu_custom_call.1} parent=11 // pred_fallthru
          _
        // Predicated region
        $region37: #{tpu_custom_call.1} parent=11 // pred_check
          %p289 = pneg %p179
        $region38: #{tpu_custom_call.1} parent=11 // pred_check_branch
          %291 = sbr.rel (%p289) target = $region40
        $region39: #{tpu_custom_call.1} parent=11 // pred_region
          %s293 = ssub.s32 2048, 2048
          %294 = vsyncadd [#allocation10], %s293
          %s295 = sshll.u32 [#allocation9], 4
          %s296 = int_to_ptr.vmem [resolvable:$true] %s295
          %301 = dma.hbm_to_vmem [thread:$0]  %s6, 2048, %s296, [#allocation10], 128, 128, 8
        $region40: #{tpu_custom_call.1} parent=11 // pred_fallthru
          _
        // Predicated region
        $region41: #{tpu_custom_call.1} parent=11 // pred_check
          %p302 = pneg %p200
        $region42: #{tpu_custom_call.1} parent=11 // pred_check_branch
          %304 = sbr.rel (%p302) target = $region44
        $region43: #{tpu_custom_call.1} parent=11 // pred_region
          _
        $region44: #{tpu_custom_call.1} parent=11 // pred_fallthru
          _
      $region12: #{tpu_custom_call.1} parent=5 // pred_fallthru
        _
      %p305 = scmp.lt.s32.totalorder %s20, 3
      // Predicated region
      $region45: #{tpu_custom_call.1} parent=5 // pred_check
        %p306 = pneg %p305
      $region46: #{tpu_custom_call.1} parent=5 // pred_check_branch
        %308 = sbr.rel (%p306) target = $region48
      $region47: #{tpu_custom_call.1} parent=5 // pred_region
        _
      $region48: #{tpu_custom_call.1} parent=5 // pred_fallthru
        _
      %p309 = scmp.le.s32.totalorder 1, %s20
      %p310 = scmp.lt.s32.totalorder %s20, 4
      %p311 = pnand %p309, %p310
      %p312 = pneg %p311
      // Predicated region
      $region49: #{tpu_custom_call.1} parent=5 // pred_check
        _
      $region50: #{tpu_custom_call.1} parent=5 // pred_check_branch
        %314 = sbr.rel (%p311) target = $region52
      $region51: #{tpu_custom_call.1} parent=5 // pred_region
        %s315 = ssub.s32 %s20, 1
        // Predicated region
        $region53: #{tpu_custom_call.1} parent=51 // pred_check
          %p316 = pneg %p53
        $region54: #{tpu_custom_call.1} parent=51 // pred_check_branch
          %318 = sbr.rel (%p316) target = $region56
        $region55: #{tpu_custom_call.1} parent=51 // pred_region
          %319 = dma.done [#allocation4], 4096
        $region56: #{tpu_custom_call.1} parent=51 // pred_fallthru
          _
        // Predicated region
        $region57: #{tpu_custom_call.1} parent=51 // pred_check
          %p320 = pneg %p95
        $region58: #{tpu_custom_call.1} parent=51 // pred_check_branch
          %322 = sbr.rel (%p320) target = $region60
        $region59: #{tpu_custom_call.1} parent=51 // pred_region
          %323 = dma.done [#allocation7], 4096
        $region60: #{tpu_custom_call.1} parent=51 // pred_fallthru
          _
        // Predicated region
        $region61: #{tpu_custom_call.1} parent=51 // pred_check
          %p324 = pneg %p137
        $region62: #{tpu_custom_call.1} parent=51 // pred_check_branch
          %326 = sbr.rel (%p324) target = $region64
        $region63: #{tpu_custom_call.1} parent=51 // pred_region
          %327 = dma.done [#allocation7], 2048
        $region64: #{tpu_custom_call.1} parent=51 // pred_fallthru
          _
        // Predicated region
        $region65: #{tpu_custom_call.1} parent=51 // pred_check
          %p328 = pneg %p179
        $region66: #{tpu_custom_call.1} parent=51 // pred_check_branch
          %330 = sbr.rel (%p328) target = $region68
        $region67: #{tpu_custom_call.1} parent=51 // pred_region
          %331 = dma.done [#allocation10], 2048
        $region68: #{tpu_custom_call.1} parent=51 // pred_fallthru
          _
        %p332 = pneg %p53
        %p333 = pneg %p50
        %p334 = pneg %p74
        %p335 = pneg %p71
        %p336 = pneg %p95
        %p337 = pneg %p92
        %p338 = pneg %p116
        %p339 = pneg %p113
        %p340 = pneg %p137
        %p341 = pneg %p134
        %p342 = pneg %p158
        %p343 = pneg %p155
        %p344 = pneg %p179
        %p345 = pneg %p176
        %p346 = pneg %p200
        %p347 = pneg %p197
        %p348 = pneg %p226
        %p349 = pneg %p223
        %s350 = sand.u32 %s213, 1
        %s351 = scalar_lea.sflag [#allocation5], %s350
        %s352 = sand.u32 %s213, 1
        %s353 = smul.addr %s352, 8
        %s354 = scalar_lea.vmem [#allocation11], %s353
        %s356 = smul.u32 %s30, 256
        %p357 = scmp.eq.s32.totalorder %s29, 0
        %p358 = scmp.eq.s32.totalorder %s30, 0
        %p359 = pnand %p357, %p358
        %p360 = pneg %p359
        // Predicated region
        $region69: #{tpu_custom_call.1} parent=51 // pred_check
          _
        $region70: #{tpu_custom_call.1} parent=51 // pred_check_branch
          %362 = sbr.rel (%p359) target = $region72
        $region71: #{tpu_custom_call.1} parent=51 // pred_region
          %v363 = vld [vmem:[#allocation6] sm:$0xff]
          %v364 = vld [vmem:[#allocation6 + $0x8] sm:$0xff]
          %v365 = vld [vmem:[#allocation6 + $0x10] sm:$0xff]
          %v366 = vld [vmem:[#allocation6 + $0x18] sm:$0xff]
          %v367 = vld [vmem:[#allocation6 + $0x20] sm:$0xff]
          %v368 = vld [vmem:[#allocation6 + $0x28] sm:$0xff]
          %v369 = vld [vmem:[#allocation6 + $0x30] sm:$0xff]
          %v370 = vld [vmem:[#allocation6 + $0x38] sm:$0xff]
          %v371 = vld [vmem:[#allocation6 + $0x40] sm:$0xff]
          %v372 = vld [vmem:[#allocation6 + $0x48] sm:$0xff]
          %v373 = vld [vmem:[#allocation6 + $0x50] sm:$0xff]
          %v374 = vld [vmem:[#allocation6 + $0x58] sm:$0xff]
          %v375 = vld [vmem:[#allocation6 + $0x60] sm:$0xff]
          %v376 = vld [vmem:[#allocation6 + $0x68] sm:$0xff]
          %v377 = vld [vmem:[#allocation6 + $0x70] sm:$0xff]
          %v378 = vld [vmem:[#allocation6 + $0x78] sm:$0xff]
          %v379 = vld [vmem:[#allocation6 + $0x80] sm:$0xff]
          %v380 = vld [vmem:[#allocation6 + $0x88] sm:$0xff]
          %v381 = vld [vmem:[#allocation6 + $0x90] sm:$0xff]
          %v382 = vld [vmem:[#allocation6 + $0x98] sm:$0xff]
          %v383 = vld [vmem:[#allocation6 + $0xa0] sm:$0xff]
          %v384 = vld [vmem:[#allocation6 + $0xa8] sm:$0xff]
          %v385 = vld [vmem:[#allocation6 + $0xb0] sm:$0xff]
          %v386 = vld [vmem:[#allocation6 + $0xb8] sm:$0xff]
          %v387 = vld [vmem:[#allocation6 + $0xc0] sm:$0xff]
          %v388 = vld [vmem:[#allocation6 + $0xc8] sm:$0xff]
          %v389 = vld [vmem:[#allocation6 + $0xd0] sm:$0xff]
          %v390 = vld [vmem:[#allocation6 + $0xd8] sm:$0xff]
          %v391 = vld [vmem:[#allocation6 + $0xe0] sm:$0xff]
          %v392 = vld [vmem:[#allocation6 + $0xe8] sm:$0xff]
          %v393 = vld [vmem:[#allocation6 + $0xf0] sm:$0xff]
          %v394 = vld [vmem:[#allocation6 + $0xf8] sm:$0xff]
          %v395 = vpack.c.bf16 %v364, %v363
          %v396 = vpack.c.bf16 %v366, %v365
          %v397 = vpack.c.bf16 %v368, %v367
          %v398 = vpack.c.bf16 %v370, %v369
          %v399 = vpack.c.bf16 %v372, %v371
          %v400 = vpack.c.bf16 %v374, %v373
          %v401 = vpack.c.bf16 %v376, %v375
          %v402 = vpack.c.bf16 %v378, %v377
          %v403 = vpack.c.bf16 %v380, %v379
          %v404 = vpack.c.bf16 %v382, %v381
          %v405 = vpack.c.bf16 %v384, %v383
          %v406 = vpack.c.bf16 %v386, %v385
          %v407 = vpack.c.bf16 %v388, %v387
          %v408 = vpack.c.bf16 %v390, %v389
          %v409 = vpack.c.bf16 %v392, %v391
          %v410 = vpack.c.bf16 %v394, %v393
          %411 = vst [vmem:[#allocation2] sm:$0xff] %v395
          %412 = vst [vmem:[#allocation2 + $0x8] sm:$0xff] %v396
          %413 = vst [vmem:[#allocation2 + $0x10] sm:$0xff] %v397
          %414 = vst [vmem:[#allocation2 + $0x18] sm:$0xff] %v398
          %415 = vst [vmem:[#allocation2 + $0x20] sm:$0xff] %v399
          %416 = vst [vmem:[#allocation2 + $0x28] sm:$0xff] %v400
          %417 = vst [vmem:[#allocation2 + $0x30] sm:$0xff] %v401
          %418 = vst [vmem:[#allocation2 + $0x38] sm:$0xff] %v402
          %419 = vst [vmem:[#allocation2 + $0x40] sm:$0xff] %v403
          %420 = vst [vmem:[#allocation2 + $0x48] sm:$0xff] %v404
          %421 = vst [vmem:[#allocation2 + $0x50] sm:$0xff] %v405
          %422 = vst [vmem:[#allocation2 + $0x58] sm:$0xff] %v406
          %423 = vst [vmem:[#allocation2 + $0x60] sm:$0xff] %v407
          %424 = vst [vmem:[#allocation2 + $0x68] sm:$0xff] %v408
          %425 = vst [vmem:[#allocation2 + $0x70] sm:$0xff] %v409
          %426 = vst [vmem:[#allocation2 + $0x78] sm:$0xff] %v410
        $region72: #{tpu_custom_call.1} parent=51 // pred_fallthru
          _
        %p427 = scmp.lt.s32.totalorder %s29, 0
        %s428 = ssub.s32 0, %s29
        %s429 = scalar_select %p427, %s428, %s29
        %s430 = sand.u32 %s429, 1
        %s431 = ssub.s32 0, %s430
        %s432 = scalar_select %p427, %s431, %s430
        %p433 = scmp.ne.s32.totalorder %s432, 0
        %p434 = scmp.lt.s32.totalorder %s432, 0
        %p435 = pnand %p434, %p433
        %p436 = pneg %p435
        %s437 = sadd.s32 %s432, 2
        %s438 = scalar_select %p436, %s437, %s432
        %s439 = sadd.s32 %s29, 1
        %p440 = scmp.lt.s32.totalorder %s439, 0
        %s441 = ssub.s32 0, %s439
        %s442 = scalar_select %p440, %s441, %s439
        %s443 = sand.u32 %s442, 1
        %s444 = ssub.s32 0, %s443
        %s445 = scalar_select %p440, %s444, %s443
        %p446 = scmp.ne.s32.totalorder %s445, 0
        %p447 = scmp.lt.s32.totalorder %s445, 0
        %p448 = pnand %p447, %p446
        %p449 = pneg %p448
        %s450 = sadd.s32 %s445, 2
        %s451 = scalar_select %p449, %s450, %s445
        %s452 = sshra.s32 %s356, 3
        %s453 = sand.u32 %s356, 7
        %s454 = smul.u32 %s452, 2
        %s455 = smul.addr %s454, 4
        %s456 = scalar_lea.vmem [#allocation3], %s455
        %v457 = vld [vmem:[%s456] sm:$0xff]
        %v458 = vld [vmem:[%s456 + $0x8] sm:$0xff]
        %v459 = vld [vmem:[%s456 + $0x10] sm:$0xff]
        %v460 = vld [vmem:[%s456 + $0x18] sm:$0xff]
        %v461 = vld [vmem:[%s456 + $0x20] sm:$0xff]
        %v462 = vld [vmem:[%s456 + $0x28] sm:$0xff]
        %v463 = vld [vmem:[%s456 + $0x30] sm:$0xff]
        %v464 = vld [vmem:[%s456 + $0x38] sm:$0xff]
        %v465 = vld [vmem:[%s456 + $0x40] sm:$0xff]
        %v466 = vld [vmem:[%s456 + $0x48] sm:$0xff]
        %v467 = vld [vmem:[%s456 + $0x50] sm:$0xff]
        %v468 = vld [vmem:[%s456 + $0x58] sm:$0xff]
        %v469 = vld [vmem:[%s456 + $0x60] sm:$0xff]
        %v470 = vld [vmem:[%s456 + $0x68] sm:$0xff]
        %v471 = vld [vmem:[%s456 + $0x70] sm:$0xff]
        %v472 = vld [vmem:[%s456 + $0x78] sm:$0xff]
        %v473 = vld [vmem:[%s456 + $0x80] sm:$0xff]
        %v474 = vld [vmem:[%s456 + $0x88] sm:$0xff]
        %v475 = vld [vmem:[%s456 + $0x90] sm:$0xff]
        %v476 = vld [vmem:[%s456 + $0x98] sm:$0xff]
        %v477 = vld [vmem:[%s456 + $0xa0] sm:$0xff]
        %v478 = vld [vmem:[%s456 + $0xa8] sm:$0xff]
        %v479 = vld [vmem:[%s456 + $0xb0] sm:$0xff]
        %v480 = vld [vmem:[%s456 + $0xb8] sm:$0xff]
        %v481 = vld [vmem:[%s456 + $0xc0] sm:$0xff]
        %v482 = vld [vmem:[%s456 + $0xc8] sm:$0xff]
        %v483 = vld [vmem:[%s456 + $0xd0] sm:$0xff]
        %v484 = vld [vmem:[%s456 + $0xd8] sm:$0xff]
        %v485 = vld [vmem:[%s456 + $0xe0] sm:$0xff]
        %v486 = vld [vmem:[%s456 + $0xe8] sm:$0xff]
        %v487 = vld [vmem:[%s456 + $0xf0] sm:$0xff]
        %v488 = vld [vmem:[%s456 + $0xf8] sm:$0xff]
        %s489 = smul.u32 %s438, 16
        %s490 = smul.addr %s489, 8
        %s491 = scalar_lea.vmem [#allocation2], %s490
        %v492 = vld [vmem:[%s491] sm:$0xff]
        %v493 = vld [vmem:[%s491 + $0x8] sm:$0xff]
        %v494 = vld [vmem:[%s491 + $0x10] sm:$0xff]
        %v495 = vld [vmem:[%s491 + $0x18] sm:$0xff]
        %v496 = vld [vmem:[%s491 + $0x20] sm:$0xff]
        %v497 = vld [vmem:[%s491 + $0x28] sm:$0xff]
        %v498 = vld [vmem:[%s491 + $0x30] sm:$0xff]
        %v499 = vld [vmem:[%s491 + $0x38] sm:$0xff]
        %v500 = vld [vmem:[%s491 + $0x40] sm:$0xff]
        %v501 = vld [vmem:[%s491 + $0x48] sm:$0xff]
        %v502 = vld [vmem:[%s491 + $0x50] sm:$0xff]
        %v503 = vld [vmem:[%s491 + $0x58] sm:$0xff]
        %v504 = vld [vmem:[%s491 + $0x60] sm:$0xff]
        %v505 = vld [vmem:[%s491 + $0x68] sm:$0xff]
        %v506 = vld [vmem:[%s491 + $0x70] sm:$0xff]
        %v507 = vld [vmem:[%s491 + $0x78] sm:$0xff]
        %v540 = vunpack.c.l.b16 %v457
        %v541 = vunpack.c.h.b16 %v457
        %v542 = vunpack.c.l.b16 %v458
        %v543 = vunpack.c.h.b16 %v458
        %v544 = vunpack.c.l.b16 %v459
        %v545 = vunpack.c.h.b16 %v459
        %v546 = vunpack.c.l.b16 %v460
        %v547 = vunpack.c.h.b16 %v460
        %v548 = vunpack.c.l.b16 %v461
        %v549 = vunpack.c.h.b16 %v461
        %v550 = vunpack.c.l.b16 %v462
        %v551 = vunpack.c.h.b16 %v462
        %v552 = vunpack.c.l.b16 %v463
        %v553 = vunpack.c.h.b16 %v463
        %v554 = vunpack.c.l.b16 %v464
        %v555 = vunpack.c.h.b16 %v464
        %v556 = vunpack.c.l.b16 %v465
        %v557 = vunpack.c.h.b16 %v465
        %v558 = vunpack.c.l.b16 %v466
        %v559 = vunpack.c.h.b16 %v466
        %v560 = vunpack.c.l.b16 %v467
        %v561 = vunpack.c.h.b16 %v467
        %v562 = vunpack.c.l.b16 %v468
        %v563 = vunpack.c.h.b16 %v468
        %v564 = vunpack.c.l.b16 %v469
        %v565 = vunpack.c.h.b16 %v469
        %v566 = vunpack.c.l.b16 %v470
        %v567 = vunpack.c.h.b16 %v470
        %v568 = vunpack.c.l.b16 %v471
        %v569 = vunpack.c.h.b16 %v471
        %v570 = vunpack.c.l.b16 %v472
        %v571 = vunpack.c.h.b16 %v472
        %v572 = vunpack.c.l.b16 %v473
        %v573 = vunpack.c.h.b16 %v473
        %v574 = vunpack.c.l.b16 %v474
        %v575 = vunpack.c.h.b16 %v474
        %v576 = vunpack.c.l.b16 %v475
        %v577 = vunpack.c.h.b16 %v475
        %v578 = vunpack.c.l.b16 %v476
        %v579 = vunpack.c.h.b16 %v476
        %v580 = vunpack.c.l.b16 %v477
        %v581 = vunpack.c.h.b16 %v477
        %v582 = vunpack.c.l.b16 %v478
        %v583 = vunpack.c.h.b16 %v478
        %v584 = vunpack.c.l.b16 %v479
        %v585 = vunpack.c.h.b16 %v479
        %v586 = vunpack.c.l.b16 %v480
        %v587 = vunpack.c.h.b16 %v480
        %v588 = vunpack.c.l.b16 %v481
        %v589 = vunpack.c.h.b16 %v481
        %v590 = vunpack.c.l.b16 %v482
        %v591 = vunpack.c.h.b16 %v482
        %v592 = vunpack.c.l.b16 %v483
        %v593 = vunpack.c.h.b16 %v483
        %v594 = vunpack.c.l.b16 %v484
        %v595 = vunpack.c.h.b16 %v484
        %v596 = vunpack.c.l.b16 %v485
        %v597 = vunpack.c.h.b16 %v485
        %v598 = vunpack.c.l.b16 %v486
        %v599 = vunpack.c.h.b16 %v486
        %v600 = vunpack.c.l.b16 %v487
        %v601 = vunpack.c.h.b16 %v487
        %v602 = vunpack.c.l.b16 %v488
        %v603 = vunpack.c.h.b16 %v488
        %v604 = vpack.c.b16 %v542, %v540
        %v605 = vpack.c.b16 %v543, %v541
        %v606 = vpack.c.b16 %v546, %v544
        %v607 = vpack.c.b16 %v547, %v545
        %v608 = vpack.c.b16 %v550, %v548
        %v609 = vpack.c.b16 %v551, %v549
        %v610 = vpack.c.b16 %v554, %v552
        %v611 = vpack.c.b16 %v555, %v553
        %v612 = vpack.c.b16 %v558, %v556
        %v613 = vpack.c.b16 %v559, %v557
        %v614 = vpack.c.b16 %v562, %v560
        %v615 = vpack.c.b16 %v563, %v561
        %v616 = vpack.c.b16 %v566, %v564
        %v617 = vpack.c.b16 %v567, %v565
        %v618 = vpack.c.b16 %v570, %v568
        %v619 = vpack.c.b16 %v571, %v569
        %v620 = vpack.c.b16 %v574, %v572
        %v621 = vpack.c.b16 %v575, %v573
        %v622 = vpack.c.b16 %v578, %v576
        %v623 = vpack.c.b16 %v579, %v577
        %v624 = vpack.c.b16 %v582, %v580
        %v625 = vpack.c.b16 %v583, %v581
        %v626 = vpack.c.b16 %v586, %v584
        %v627 = vpack.c.b16 %v587, %v585
        %v628 = vpack.c.b16 %v590, %v588
        %v629 = vpack.c.b16 %v591, %v589
        %v630 = vpack.c.b16 %v594, %v592
        %v631 = vpack.c.b16 %v595, %v593
        %v632 = vpack.c.b16 %v598, %v596
        %v633 = vpack.c.b16 %v599, %v597
        %v634 = vpack.c.b16 %v602, %v600
        %v635 = vpack.c.b16 %v603, %v601
        %668 = vmatprep.subr.bf16.mxu0 0
        %669 = vmatpush1.bf16.msra.mxu0 %v492
        %670 = vmatprep.subr.bf16.mxu0 0
        %671 = vmatpush1.bf16.msra.mxu0 %v493
        %672 = vmatprep.subr.bf16.mxu0 0
        %673 = vmatpush1.bf16.msra.mxu0 %v494
        %674 = vmatprep.subr.bf16.mxu0 0
        %675 = vmatpush1.bf16.msra.mxu0 %v495
        %676 = vmatprep.subr.bf16.mxu0 0
        %677 = vmatpush1.bf16.msra.mxu0 %v496
        %678 = vmatprep.subr.bf16.mxu0 0
        %679 = vmatpush1.bf16.msra.mxu0 %v497
        %680 = vmatprep.subr.bf16.mxu0 0
        %681 = vmatpush1.bf16.msra.mxu0 %v498
        %682 = vmatprep.subr.bf16.mxu0 0
        %683 = vmatpush1.bf16.msra.mxu0 %v499
        %684 = vmatprep.subr.bf16.mxu0 0
        %685 = vmatpush1.bf16.msra.mxu0 %v500
        %686 = vmatprep.subr.bf16.mxu0 0
        %687 = vmatpush1.bf16.msra.mxu0 %v501
        %688 = vmatprep.subr.bf16.mxu0 0
        %689 = vmatpush1.bf16.msra.mxu0 %v502
        %690 = vmatprep.subr.bf16.mxu0 0
        %691 = vmatpush1.bf16.msra.mxu0 %v503
        %692 = vmatprep.subr.bf16.mxu0 0
        %693 = vmatpush1.bf16.msra.mxu0 %v504
        %694 = vmatprep.subr.bf16.mxu0 0
        %695 = vmatpush1.bf16.msra.mxu0 %v505
        %696 = vmatprep.subr.bf16.mxu0 0
        %697 = vmatpush1.bf16.msra.mxu0 %v506
        %698 = vmatprep.subr.bf16.mxu0 0
        %699 = vmatpush1.bf16.msra.mxu0 %v507
        %700 = vmatprep.mubr.bf16.mxu0 %v605
        %701 = vmatmul.mubr.bf16.gmra.mrb[0].mxu0 %v604
        %v702 = vpop.f32.mrb[0].mxu0
        %v703 = vadd.f32 0.0, %v702
        %v704 = vpop.f32.mrb[0].mxu0
        %v705 = vpop.f32.mrb[0].mxu0
        %v706 = vadd.f32 0.0, %v705
        %v707 = vpop.f32.mrb[0].mxu0
        %708 = vmatprep.mubr.bf16.mxu0 %v607
        %709 = vmatmul.mubr.bf16.gmra.mrb[0].mxu0 %v606
        %v710 = vpop.f32.mrb[0].mxu0
        %v711 = vadd.f32 0.0, %v710
        %v712 = vpop.f32.mrb[0].mxu0
        %v713 = vpop.f32.mrb[0].mxu0
        %v714 = vadd.f32 0.0, %v713
        %v715 = vpop.f32.mrb[0].mxu0
        %716 = vmatprep.mubr.bf16.mxu0 %v609
        %717 = vmatmul.mubr.bf16.gmra.mrb[0].mxu0 %v608
        %v718 = vpop.f32.mrb[0].mxu0
        %v719 = vadd.f32 0.0, %v718
        %v720 = vpop.f32.mrb[0].mxu0
        %v721 = vpop.f32.mrb[0].mxu0
        %v722 = vadd.f32 0.0, %v721
        %v723 = vpop.f32.mrb[0].mxu0
        %724 = vmatprep.mubr.bf16.mxu0 %v611
        %725 = vmatmul.mubr.bf16.gmra.mrb[0].mxu0 %v610
        %v726 = vpop.f32.mrb[0].mxu0
        %v727 = vadd.f32 0.0, %v726
        %v728 = vpop.f32.mrb[0].mxu0
        %v729 = vpop.f32.mrb[0].mxu0
        %v730 = vadd.f32 0.0, %v729
        %v731 = vpop.f32.mrb[0].mxu0
        %732 = vmatprep.mubr.bf16.mxu0 %v613
        %733 = vmatmul.mubr.bf16.gmra.mrb[0].mxu0 %v612
        %v734 = vpop.f32.mrb[0].mxu0
        %v735 = vadd.f32 0.0, %v734
        %v736 = vpop.f32.mrb[0].mxu0
        %v737 = vpop.f32.mrb[0].mxu0
        %v738 = vadd.f32 0.0, %v737
        %v739 = vpop.f32.mrb[0].mxu0
        %740 = vmatprep.mubr.bf16.mxu0 %v615
        %741 = vmatmul.mubr.bf16.gmra.mrb[0].mxu0 %v614
        %v742 = vpop.f32.mrb[0].mxu0
        %v743 = vadd.f32 0.0, %v742
        %v744 = vpop.f32.mrb[0].mxu0
        %v745 = vpop.f32.mrb[0].mxu0
        %v746 = vadd.f32 0.0, %v745
        %v747 = vpop.f32.mrb[0].mxu0
        %748 = vmatprep.mubr.bf16.mxu0 %v617
        %749 = vmatmul.mubr.bf16.gmra.mrb[0].mxu0 %v616
        %v750 = vpop.f32.mrb[0].mxu0
        %v751 = vadd.f32 0.0, %v750
        %v752 = vpop.f32.mrb[0].mxu0
        %v753 = vpop.f32.mrb[0].mxu0
        %v754 = vadd.f32 0.0, %v753
        %v755 = vpop.f32.mrb[0].mxu0
        %756 = vmatprep.mubr.bf16.mxu0 %v619
        %757 = vmatmul.mubr.bf16.gmra.mrb[0].mxu0 %v618
        %v758 = vpop.f32.mrb[0].mxu0
        %v759 = vadd.f32 0.0, %v758
        %v760 = vpop.f32.mrb[0].mxu0
        %v761 = vpop.f32.mrb[0].mxu0
        %v762 = vadd.f32 0.0, %v761
        %v763 = vpop.f32.mrb[0].mxu0
        %764 = vmatprep.mubr.bf16.mxu0 %v621
        %765 = vmatmul.mubr.bf16.gmra.mrb[0].mxu0 %v620
        %v766 = vpop.f32.mrb[0].mxu0
        %v767 = vadd.f32 0.0, %v766
        %v768 = vpop.f32.mrb[0].mxu0
        %v769 = vpop.f32.mrb[0].mxu0
        %v770 = vadd.f32 0.0, %v769
        %v771 = vpop.f32.mrb[0].mxu0
        %772 = vmatprep.mubr.bf16.mxu0 %v623
        %773 = vmatmul.mubr.bf16.gmra.mrb[0].mxu0 %v622
        %v774 = vpop.f32.mrb[0].mxu0
        %v775 = vadd.f32 0.0, %v774
        %v776 = vpop.f32.mrb[0].mxu0
        %v777 = vpop.f32.mrb[0].mxu0
        %v778 = vadd.f32 0.0, %v777
        %v779 = vpop.f32.mrb[0].mxu0
        %780 = vmatprep.mubr.bf16.mxu0 %v625
        %781 = vmatmul.mubr.bf16.gmra.mrb[0].mxu0 %v624
        %v782 = vpop.f32.mrb[0].mxu0
        %v783 = vadd.f32 0.0, %v782
        %v784 = vpop.f32.mrb[0].mxu0
        %v785 = vpop.f32.mrb[0].mxu0
        %v786 = vadd.f32 0.0, %v785
        %v787 = vpop.f32.mrb[0].mxu0
        %788 = vmatprep.mubr.bf16.mxu0 %v627
        %789 = vmatmul.mubr.bf16.gmra.mrb[0].mxu0 %v626
        %v790 = vpop.f32.mrb[0].mxu0
        %v791 = vadd.f32 0.0, %v790
        %v792 = vpop.f32.mrb[0].mxu0
        %v793 = vpop.f32.mrb[0].mxu0
        %v794 = vadd.f32 0.0, %v793
        %v795 = vpop.f32.mrb[0].mxu0
        %796 = vmatprep.mubr.bf16.mxu0 %v629
        %797 = vmatmul.mubr.bf16.gmra.mrb[0].mxu0 %v628
        %v798 = vpop.f32.mrb[0].mxu0
        %v799 = vadd.f32 0.0, %v798
        %v800 = vpop.f32.mrb[0].mxu0
        %v801 = vpop.f32.mrb[0].mxu0
        %v802 = vadd.f32 0.0, %v801
        %v803 = vpop.f32.mrb[0].mxu0
        %804 = vmatprep.mubr.bf16.mxu0 %v631
        %805 = vmatmul.mubr.bf16.gmra.mrb[0].mxu0 %v630
        %v806 = vpop.f32.mrb[0].mxu0
        %v807 = vadd.f32 0.0, %v806
        %v808 = vpop.f32.mrb[0].mxu0
        %v809 = vpop.f32.mrb[0].mxu0
        %v810 = vadd.f32 0.0, %v809
        %v811 = vpop.f32.mrb[0].mxu0
        %812 = vmatprep.mubr.bf16.mxu0 %v633
        %813 = vmatmul.mubr.bf16.gmra.mrb[0].mxu0 %v632
        %v814 = vpop.f32.mrb[0].mxu0
        %v815 = vadd.f32 0.0, %v814
        %v816 = vpop.f32.mrb[0].mxu0
        %v817 = vpop.f32.mrb[0].mxu0
        %v818 = vadd.f32 0.0, %v817
        %v819 = vpop.f32.mrb[0].mxu0
        %820 = vmatprep.mubr.bf16.mxu0 %v635
        %821 = vmatmul.mubr.bf16.gmra.mrb[0].mxu0 %v634
        %v822 = vpop.f32.mrb[0].mxu0
        %v823 = vadd.f32 0.0, %v822
        %v824 = vpop.f32.mrb[0].mxu0
        %v825 = vpop.f32.mrb[0].mxu0
        %v826 = vadd.f32 0.0, %v825
        %v827 = vpop.f32.mrb[0].mxu0
        %828 = vdwg.mxu0
        %s829 = sshra.s32 %s356, 4
        %s830 = sand.u32 %s356, 15
        %s831 = sadd.s32 %s829, %s489
        %s832 = smul.addr %s831, 8
        %s833 = scalar_lea.vmem [#allocation2], %s832
        %v834 = vld [vmem:[%s833] sm:$0xff]
        %v835 = vld [vmem:[%s833 + $0x8] sm:$0xff]
        %v836 = vld [vmem:[%s833 + $0x10] sm:$0xff]
        %v837 = vld [vmem:[%s833 + $0x18] sm:$0xff]
        %v838 = vld [vmem:[%s833 + $0x20] sm:$0xff]
        %v839 = vld [vmem:[%s833 + $0x28] sm:$0xff]
        %v840 = vld [vmem:[%s833 + $0x30] sm:$0xff]
        %v841 = vld [vmem:[%s833 + $0x38] sm:$0xff]
        %v842 = vld [vmem:[%s833 + $0x40] sm:$0xff]
        %v843 = vld [vmem:[%s833 + $0x48] sm:$0xff]
        %v844 = vld [vmem:[%s833 + $0x50] sm:$0xff]
        %v845 = vld [vmem:[%s833 + $0x58] sm:$0xff]
        %v846 = vld [vmem:[%s833 + $0x60] sm:$0xff]
        %v847 = vld [vmem:[%s833 + $0x68] sm:$0xff]
        %v848 = vld [vmem:[%s833 + $0x70] sm:$0xff]
        %v849 = vld [vmem:[%s833 + $0x78] sm:$0xff]
        %v850 = vpack.c.bf16 %v706, %v703
        %v851 = vpack.c.bf16 %v714, %v711
        %v852 = vpack.c.bf16 %v722, %v719
        %v853 = vpack.c.bf16 %v730, %v727
        %v854 = vpack.c.bf16 %v738, %v735
        %v855 = vpack.c.bf16 %v746, %v743
        %v856 = vpack.c.bf16 %v754, %v751
        %v857 = vpack.c.bf16 %v762, %v759
        %v858 = vpack.c.bf16 %v770, %v767
        %v859 = vpack.c.bf16 %v778, %v775
        %v860 = vpack.c.bf16 %v786, %v783
        %v861 = vpack.c.bf16 %v794, %v791
        %v862 = vpack.c.bf16 %v802, %v799
        %v863 = vpack.c.bf16 %v810, %v807
        %v864 = vpack.c.bf16 %v818, %v815
        %v865 = vpack.c.bf16 %v826, %v823
        %v866 = vld [vmem:[#allocation8] sm:$0xf]
        %v867 = vld [vmem:[#allocation8 + $0x4] sm:$0xf]
        %v868 = vld [vmem:[#allocation8 + $0x8] sm:$0xf]
        %v869 = vld [vmem:[#allocation8 + $0xc] sm:$0xf]
        %v870 = vld [vmem:[#allocation8 + $0x10] sm:$0xf]
        %v871 = vld [vmem:[#allocation8 + $0x14] sm:$0xf]
        %v872 = vld [vmem:[#allocation8 + $0x18] sm:$0xf]
        %v873 = vld [vmem:[#allocation8 + $0x1c] sm:$0xf]
        %v874 = vld [vmem:[#allocation8 + $0x20] sm:$0xf]
        %v875 = vld [vmem:[#allocation8 + $0x24] sm:$0xf]
        %v876 = vld [vmem:[#allocation8 + $0x28] sm:$0xf]
        %v877 = vld [vmem:[#allocation8 + $0x2c] sm:$0xf]
        %v878 = vld [vmem:[#allocation8 + $0x30] sm:$0xf]
        %v879 = vld [vmem:[#allocation8 + $0x34] sm:$0xf]
        %v880 = vld [vmem:[#allocation8 + $0x38] sm:$0xf]
        %v881 = vld [vmem:[#allocation8 + $0x3c] sm:$0xf]
        %v882 = vld [vmem:[#allocation8 + $0x40] sm:$0xf]
        %v883 = vld [vmem:[#allocation8 + $0x44] sm:$0xf]
        %v884 = vld [vmem:[#allocation8 + $0x48] sm:$0xf]
        %v885 = vld [vmem:[#allocation8 + $0x4c] sm:$0xf]
        %v886 = vld [vmem:[#allocation8 + $0x50] sm:$0xf]
        %v887 = vld [vmem:[#allocation8 + $0x54] sm:$0xf]
        %v888 = vld [vmem:[#allocation8 + $0x58] sm:$0xf]
        %v889 = vld [vmem:[#allocation8 + $0x5c] sm:$0xf]
        %v890 = vld [vmem:[#allocation8 + $0x60] sm:$0xf]
        %v891 = vld [vmem:[#allocation8 + $0x64] sm:$0xf]
        %v892 = vld [vmem:[#allocation8 + $0x68] sm:$0xf]
        %v893 = vld [vmem:[#allocation8 + $0x6c] sm:$0xf]
        %v894 = vld [vmem:[#allocation8 + $0x70] sm:$0xf]
        %v895 = vld [vmem:[#allocation8 + $0x74] sm:$0xf]
        %v896 = vld [vmem:[#allocation8 + $0x78] sm:$0xf]
        %v897 = vld [vmem:[#allocation8 + $0x7c] sm:$0xf]
        %s898 = scalar_lea.vmem [#allocation6], %s356
        %v899 = vld [vmem:[%s898] sm:$0xff]
        %v900 = vld [vmem:[%s898 + $0x8] sm:$0xff]
        %v901 = vld [vmem:[%s898 + $0x10] sm:$0xff]
        %v902 = vld [vmem:[%s898 + $0x18] sm:$0xff]
        %v903 = vld [vmem:[%s898 + $0x20] sm:$0xff]
        %v904 = vld [vmem:[%s898 + $0x28] sm:$0xff]
        %v905 = vld [vmem:[%s898 + $0x30] sm:$0xff]
        %v906 = vld [vmem:[%s898 + $0x38] sm:$0xff]
        %v907 = vld [vmem:[%s898 + $0x40] sm:$0xff]
        %v908 = vld [vmem:[%s898 + $0x48] sm:$0xff]
        %v909 = vld [vmem:[%s898 + $0x50] sm:$0xff]
        %v910 = vld [vmem:[%s898 + $0x58] sm:$0xff]
        %v911 = vld [vmem:[%s898 + $0x60] sm:$0xff]
        %v912 = vld [vmem:[%s898 + $0x68] sm:$0xff]
        %v913 = vld [vmem:[%s898 + $0x70] sm:$0xff]
        %v914 = vld [vmem:[%s898 + $0x78] sm:$0xff]
        %v915 = vld [vmem:[%s898 + $0x80] sm:$0xff]
        %v916 = vld [vmem:[%s898 + $0x88] sm:$0xff]
        %v917 = vld [vmem:[%s898 + $0x90] sm:$0xff]
        %v918 = vld [vmem:[%s898 + $0x98] sm:$0xff]
        %v919 = vld [vmem:[%s898 + $0xa0] sm:$0xff]
        %v920 = vld [vmem:[%s898 + $0xa8] sm:$0xff]
        %v921 = vld [vmem:[%s898 + $0xb0] sm:$0xff]
        %v922 = vld [vmem:[%s898 + $0xb8] sm:$0xff]
        %v923 = vld [vmem:[%s898 + $0xc0] sm:$0xff]
        %v924 = vld [vmem:[%s898 + $0xc8] sm:$0xff]
        %v925 = vld [vmem:[%s898 + $0xd0] sm:$0xff]
        %v926 = vld [vmem:[%s898 + $0xd8] sm:$0xff]
        %v927 = vld [vmem:[%s898 + $0xe0] sm:$0xff]
        %v928 = vld [vmem:[%s898 + $0xe8] sm:$0xff]
        %v929 = vld [vmem:[%s898 + $0xf0] sm:$0xff]
        %v930 = vld [vmem:[%s898 + $0xf8] sm:$0xff]
        %v963 = vunpack.c.l.b16 %v866
        %v964 = vunpack.c.l.b16 %v867
        %v965 = vunpack.c.l.b16 %v868
        %v966 = vunpack.c.l.b16 %v869
        %v967 = vunpack.c.l.b16 %v870
        %v968 = vunpack.c.l.b16 %v871
        %v969 = vunpack.c.l.b16 %v872
        %v970 = vunpack.c.l.b16 %v873
        %v971 = vunpack.c.l.b16 %v874
        %v972 = vunpack.c.l.b16 %v875
        %v973 = vunpack.c.l.b16 %v876
        %v974 = vunpack.c.l.b16 %v877
        %v975 = vunpack.c.l.b16 %v878
        %v976 = vunpack.c.l.b16 %v879
        %v977 = vunpack.c.l.b16 %v880
        %v978 = vunpack.c.l.b16 %v881
        %v979 = vunpack.c.l.b16 %v882
        %v980 = vunpack.c.l.b16 %v883
        %v981 = vunpack.c.l.b16 %v884
        %v982 = vunpack.c.l.b16 %v885
        %v983 = vunpack.c.l.b16 %v886
        %v984 = vunpack.c.l.b16 %v887
        %v985 = vunpack.c.l.b16 %v888
        %v986 = vunpack.c.l.b16 %v889
        %v987 = vunpack.c.l.b16 %v890
        %v988 = vunpack.c.l.b16 %v891
        %v989 = vunpack.c.l.b16 %v892
        %v990 = vunpack.c.l.b16 %v893
        %v991 = vunpack.c.l.b16 %v894
        %v992 = vunpack.c.l.b16 %v895
        %v993 = vunpack.c.l.b16 %v896
        %v994 = vunpack.c.l.b16 %v897
        %v995 = vpack.c.b16 %v964, %v963
        %v996 = vpack.c.b16 %v966, %v965
        %v997 = vpack.c.b16 %v968, %v967
        %v998 = vpack.c.b16 %v970, %v969
        %v999 = vpack.c.b16 %v972, %v971
        %v1000 = vpack.c.b16 %v974, %v973
        %v1001 = vpack.c.b16 %v976, %v975
        %v1002 = vpack.c.b16 %v978, %v977
        %v1003 = vpack.c.b16 %v980, %v979
        %v1004 = vpack.c.b16 %v982, %v981
        %v1005 = vpack.c.b16 %v984, %v983
        %v1006 = vpack.c.b16 %v986, %v985
        %v1007 = vpack.c.b16 %v988, %v987
        %v1008 = vpack.c.b16 %v990, %v989
        %v1009 = vpack.c.b16 %v992, %v991
        %v1010 = vpack.c.b16 %v994, %v993
        %1027 = vmatprep.subr.bf16.mxu0 0
        %1028 = vmatpush1.bf16.msra.mxu0 %v995
        %1029 = vmatprep.subr.bf16.mxu0 0
        %1030 = vmatpush1.bf16.msra.mxu0 %v996
        %1031 = vmatprep.subr.bf16.mxu0 0
        %1032 = vmatpush1.bf16.msra.mxu0 %v997
        %1033 = vmatprep.subr.bf16.mxu0 0
        %1034 = vmatpush1.bf16.msra.mxu0 %v998
        %1035 = vmatprep.subr.bf16.mxu0 0
        %1036 = vmatpush1.bf16.msra.mxu0 %v999
        %1037 = vmatprep.subr.bf16.mxu0 0
        %1038 = vmatpush1.bf16.msra.mxu0 %v1000
        %1039 = vmatprep.subr.bf16.mxu0 0
        %1040 = vmatpush1.bf16.msra.mxu0 %v1001
        %1041 = vmatprep.subr.bf16.mxu0 0
        %1042 = vmatpush1.bf16.msra.mxu0 %v1002
        %1043 = vmatprep.subr.bf16.mxu0 0
        %1044 = vmatpush1.bf16.msra.mxu0 %v1003
        %1045 = vmatprep.subr.bf16.mxu0 0
        %1046 = vmatpush1.bf16.msra.mxu0 %v1004
        %1047 = vmatprep.subr.bf16.mxu0 0
        %1048 = vmatpush1.bf16.msra.mxu0 %v1005
        %1049 = vmatprep.subr.bf16.mxu0 0
        %1050 = vmatpush1.bf16.msra.mxu0 %v1006
        %1051 = vmatprep.subr.bf16.mxu0 0
        %1052 = vmatpush1.bf16.msra.mxu0 %v1007
        %1053 = vmatprep.subr.bf16.mxu0 0
        %1054 = vmatpush1.bf16.msra.mxu0 %v1008
        %1055 = vmatprep.subr.bf16.mxu0 0
        %1056 = vmatpush1.bf16.msra.mxu0 %v1009
        %1057 = vmatprep.subr.bf16.mxu0 0
        %1058 = vmatpush1.bf16.msra.mxu0 %v1010
        %1059 = vmatprep.mubr.bf16.mxu0 %v850
        %1060 = vmatmul.mubr.bf16.gmra.mrb[0].mxu0 %v834
        %v1061 = vpop.f32.mrb[0].mxu0
        %v1062 = vadd.f32 %v899, %v1061
        %v1063 = vpop.f32.mrb[0].mxu0
        %v1064 = vpop.f32.mrb[0].mxu0
        %v1065 = vadd.f32 %v900, %v1064
        %v1066 = vpop.f32.mrb[0].mxu0
        %1067 = vmatprep.mubr.bf16.mxu0 %v851
        %1068 = vmatmul.mubr.bf16.gmra.mrb[0].mxu0 %v835
        %v1069 = vpop.f32.mrb[0].mxu0
        %v1070 = vadd.f32 %v901, %v1069
        %v1071 = vpop.f32.mrb[0].mxu0
        %v1072 = vpop.f32.mrb[0].mxu0
        %v1073 = vadd.f32 %v902, %v1072
        %v1074 = vpop.f32.mrb[0].mxu0
        %1075 = vmatprep.mubr.bf16.mxu0 %v852
        %1076 = vmatmul.mubr.bf16.gmra.mrb[0].mxu0 %v836
        %v1077 = vpop.f32.mrb[0].mxu0
        %v1078 = vadd.f32 %v903, %v1077
        %v1079 = vpop.f32.mrb[0].mxu0
        %v1080 = vpop.f32.mrb[0].mxu0
        %v1081 = vadd.f32 %v904, %v1080
        %v1082 = vpop.f32.mrb[0].mxu0
        %1083 = vmatprep.mubr.bf16.mxu0 %v853
        %1084 = vmatmul.mubr.bf16.gmra.mrb[0].mxu0 %v837
        %v1085 = vpop.f32.mrb[0].mxu0
        %v1086 = vadd.f32 %v905, %v1085
        %v1087 = vpop.f32.mrb[0].mxu0
        %v1088 = vpop.f32.mrb[0].mxu0
        %v1089 = vadd.f32 %v906, %v1088
        %v1090 = vpop.f32.mrb[0].mxu0
        %1091 = vmatprep.mubr.bf16.mxu0 %v854
        %1092 = vmatmul.mubr.bf16.gmra.mrb[0].mxu0 %v838
        %v1093 = vpop.f32.mrb[0].mxu0
        %v1094 = vadd.f32 %v907, %v1093
        %v1095 = vpop.f32.mrb[0].mxu0
        %v1096 = vpop.f32.mrb[0].mxu0
        %v1097 = vadd.f32 %v908, %v1096
        %v1098 = vpop.f32.mrb[0].mxu0
        %1099 = vmatprep.mubr.bf16.mxu0 %v855
        %1100 = vmatmul.mubr.bf16.gmra.mrb[0].mxu0 %v839
        %v1101 = vpop.f32.mrb[0].mxu0
        %v1102 = vadd.f32 %v909, %v1101
        %v1103 = vpop.f32.mrb[0].mxu0
        %v1104 = vpop.f32.mrb[0].mxu0
        %v1105 = vadd.f32 %v910, %v1104
        %v1106 = vpop.f32.mrb[0].mxu0
        %1107 = vmatprep.mubr.bf16.mxu0 %v856
        %1108 = vmatmul.mubr.bf16.gmra.mrb[0].mxu0 %v840
        %v1109 = vpop.f32.mrb[0].mxu0
        %v1110 = vadd.f32 %v911, %v1109
        %v1111 = vpop.f32.mrb[0].mxu0
        %v1112 = vpop.f32.mrb[0].mxu0
        %v1113 = vadd.f32 %v912, %v1112
        %v1114 = vpop.f32.mrb[0].mxu0
        %1115 = vmatprep.mubr.bf16.mxu0 %v857
        %1116 = vmatmul.mubr.bf16.gmra.mrb[0].mxu0 %v841
        %v1117 = vpop.f32.mrb[0].mxu0
        %v1118 = vadd.f32 %v913, %v1117
        %v1119 = vpop.f32.mrb[0].mxu0
        %v1120 = vpop.f32.mrb[0].mxu0
        %v1121 = vadd.f32 %v914, %v1120
        %v1122 = vpop.f32.mrb[0].mxu0
        %1123 = vmatprep.mubr.bf16.mxu0 %v858
        %1124 = vmatmul.mubr.bf16.gmra.mrb[0].mxu0 %v842
        %v1125 = vpop.f32.mrb[0].mxu0
        %v1126 = vadd.f32 %v915, %v1125
        %v1127 = vpop.f32.mrb[0].mxu0
        %v1128 = vpop.f32.mrb[0].mxu0
        %v1129 = vadd.f32 %v916, %v1128
        %v1130 = vpop.f32.mrb[0].mxu0
        %1131 = vmatprep.mubr.bf16.mxu0 %v859
        %1132 = vmatmul.mubr.bf16.gmra.mrb[0].mxu0 %v843
        %v1133 = vpop.f32.mrb[0].mxu0
        %v1134 = vadd.f32 %v917, %v1133
        %v1135 = vpop.f32.mrb[0].mxu0
        %v1136 = vpop.f32.mrb[0].mxu0
        %v1137 = vadd.f32 %v918, %v1136
        %v1138 = vpop.f32.mrb[0].mxu0
        %1139 = vmatprep.mubr.bf16.mxu0 %v860
        %1140 = vmatmul.mubr.bf16.gmra.mrb[0].mxu0 %v844
        %v1141 = vpop.f32.mrb[0].mxu0
        %v1142 = vadd.f32 %v919, %v1141
        %v1143 = vpop.f32.mrb[0].mxu0
        %v1144 = vpop.f32.mrb[0].mxu0
        %v1145 = vadd.f32 %v920, %v1144
        %v1146 = vpop.f32.mrb[0].mxu0
        %1147 = vmatprep.mubr.bf16.mxu0 %v861
        %1148 = vmatmul.mubr.bf16.gmra.mrb[0].mxu0 %v845
        %v1149 = vpop.f32.mrb[0].mxu0
        %v1150 = vadd.f32 %v921, %v1149
        %v1151 = vpop.f32.mrb[0].mxu0
        %v1152 = vpop.f32.mrb[0].mxu0
        %v1153 = vadd.f32 %v922, %v1152
        %v1154 = vpop.f32.mrb[0].mxu0
        %1155 = vmatprep.mubr.bf16.mxu0 %v862
        %1156 = vmatmul.mubr.bf16.gmra.mrb[0].mxu0 %v846
        %v1157 = vpop.f32.mrb[0].mxu0
        %v1158 = vadd.f32 %v923, %v1157
        %v1159 = vpop.f32.mrb[0].mxu0
        %v1160 = vpop.f32.mrb[0].mxu0
        %v1161 = vadd.f32 %v924, %v1160
        %v1162 = vpop.f32.mrb[0].mxu0
        %1163 = vmatprep.mubr.bf16.mxu0 %v863
        %1164 = vmatmul.mubr.bf16.gmra.mrb[0].mxu0 %v847
        %v1165 = vpop.f32.mrb[0].mxu0
        %v1166 = vadd.f32 %v925, %v1165
        %v1167 = vpop.f32.mrb[0].mxu0
        %v1168 = vpop.f32.mrb[0].mxu0
        %v1169 = vadd.f32 %v926, %v1168
        %v1170 = vpop.f32.mrb[0].mxu0
        %1171 = vmatprep.mubr.bf16.mxu0 %v864
        %1172 = vmatmul.mubr.bf16.gmra.mrb[0].mxu0 %v848
        %v1173 = vpop.f32.mrb[0].mxu0
        %v1174 = vadd.f32 %v927, %v1173
        %v1175 = vpop.f32.mrb[0].mxu0
        %v1176 = vpop.f32.mrb[0].mxu0
        %v1177 = vadd.f32 %v928, %v1176
        %v1178 = vpop.f32.mrb[0].mxu0
        %1179 = vmatprep.mubr.bf16.mxu0 %v865
        %1180 = vmatmul.mubr.bf16.gmra.mrb[0].mxu0 %v849
        %v1181 = vpop.f32.mrb[0].mxu0
        %v1182 = vadd.f32 %v929, %v1181
        %v1183 = vpop.f32.mrb[0].mxu0
        %v1184 = vpop.f32.mrb[0].mxu0
        %v1185 = vadd.f32 %v930, %v1184
        %v1186 = vpop.f32.mrb[0].mxu0
        %1187 = vdwg.mxu0
        %v1188 = vld [vmem:[%s5] sm:$0x1]
        %v1190 = vlaneseq
        %v1191 = vshrl.u32 %v1190, 7
        %v1192 = vsub.s32 0, %v1191
        %v1193 = vrot.slane %v1188, %v1192
        %v1195 = vadd.f32 %v1062, %v1193
        %v1196 = vadd.f32 %v1065, %v1193
        %v1197 = vadd.f32 %v1070, %v1193
        %v1198 = vadd.f32 %v1073, %v1193
        %v1199 = vadd.f32 %v1078, %v1193
        %v1200 = vadd.f32 %v1081, %v1193
        %v1201 = vadd.f32 %v1086, %v1193
        %v1202 = vadd.f32 %v1089, %v1193
        %v1203 = vadd.f32 %v1094, %v1193
        %v1204 = vadd.f32 %v1097, %v1193
        %v1205 = vadd.f32 %v1102, %v1193
        %v1206 = vadd.f32 %v1105, %v1193
        %v1207 = vadd.f32 %v1110, %v1193
        %v1208 = vadd.f32 %v1113, %v1193
        %v1209 = vadd.f32 %v1118, %v1193
        %v1210 = vadd.f32 %v1121, %v1193
        %v1211 = vadd.f32 %v1126, %v1193
        %v1212 = vadd.f32 %v1129, %v1193
        %v1213 = vadd.f32 %v1134, %v1193
        %v1214 = vadd.f32 %v1137, %v1193
        %v1215 = vadd.f32 %v1142, %v1193
        %v1216 = vadd.f32 %v1145, %v1193
        %v1217 = vadd.f32 %v1150, %v1193
        %v1218 = vadd.f32 %v1153, %v1193
        %v1219 = vadd.f32 %v1158, %v1193
        %v1220 = vadd.f32 %v1161, %v1193
        %v1221 = vadd.f32 %v1166, %v1193
        %v1222 = vadd.f32 %v1169, %v1193
        %v1223 = vadd.f32 %v1174, %v1193
        %v1224 = vadd.f32 %v1177, %v1193
        %v1225 = vadd.f32 %v1182, %v1193
        %v1226 = vadd.f32 %v1185, %v1193
        %v1227 = vmax.f32 %v1195, 0.0
        %v1228 = vmax.f32 %v1196, 0.0
        %v1229 = vmax.f32 %v1197, 0.0
        %v1230 = vmax.f32 %v1198, 0.0
        %v1231 = vmax.f32 %v1199, 0.0
        %v1232 = vmax.f32 %v1200, 0.0
        %v1233 = vmax.f32 %v1201, 0.0
        %v1234 = vmax.f32 %v1202, 0.0
        %v1235 = vmax.f32 %v1203, 0.0
        %v1236 = vmax.f32 %v1204, 0.0
        %v1237 = vmax.f32 %v1205, 0.0
        %v1238 = vmax.f32 %v1206, 0.0
        %v1239 = vmax.f32 %v1207, 0.0
        %v1240 = vmax.f32 %v1208, 0.0
        %v1241 = vmax.f32 %v1209, 0.0
        %v1242 = vmax.f32 %v1210, 0.0
        %v1243 = vmax.f32 %v1211, 0.0
        %v1244 = vmax.f32 %v1212, 0.0
        %v1245 = vmax.f32 %v1213, 0.0
        %v1246 = vmax.f32 %v1214, 0.0
        %v1247 = vmax.f32 %v1215, 0.0
        %v1248 = vmax.f32 %v1216, 0.0
        %v1249 = vmax.f32 %v1217, 0.0
        %v1250 = vmax.f32 %v1218, 0.0
        %v1251 = vmax.f32 %v1219, 0.0
        %v1252 = vmax.f32 %v1220, 0.0
        %v1253 = vmax.f32 %v1221, 0.0
        %v1254 = vmax.f32 %v1222, 0.0
        %v1255 = vmax.f32 %v1223, 0.0
        %v1256 = vmax.f32 %v1224, 0.0
        %v1257 = vmax.f32 %v1225, 0.0
        %v1258 = vmax.f32 %v1226, 0.0
        %v1259 = vpack.c.bf16 %v1228, %v1227
        %v1260 = vpack.c.bf16 %v1230, %v1229
        %v1261 = vpack.c.bf16 %v1232, %v1231
        %v1262 = vpack.c.bf16 %v1234, %v1233
        %v1263 = vpack.c.bf16 %v1236, %v1235
        %v1264 = vpack.c.bf16 %v1238, %v1237
        %v1265 = vpack.c.bf16 %v1240, %v1239
        %v1266 = vpack.c.bf16 %v1242, %v1241
        %v1267 = vpack.c.bf16 %v1244, %v1243
        %v1268 = vpack.c.bf16 %v1246, %v1245
        %v1269 = vpack.c.bf16 %v1248, %v1247
        %v1270 = vpack.c.bf16 %v1250, %v1249
        %v1271 = vpack.c.bf16 %v1252, %v1251
        %v1272 = vpack.c.bf16 %v1254, %v1253
        %v1273 = vpack.c.bf16 %v1256, %v1255
        %v1274 = vpack.c.bf16 %v1258, %v1257
        %s1275 = smul.u32 %s451, 16
        %s1276 = sadd.s32 %s829, %s1275
        %s1277 = smul.addr %s1276, 8
        %s1278 = scalar_lea.vmem [#allocation2], %s1277
        %1279 = vst [vmem:[%s1278] sm:$0xff] %v1259
        %1280 = vst [vmem:[%s1278 + $0x8] sm:$0xff] %v1260
        %1281 = vst [vmem:[%s1278 + $0x10] sm:$0xff] %v1261
        %1282 = vst [vmem:[%s1278 + $0x18] sm:$0xff] %v1262
        %1283 = vst [vmem:[%s1278 + $0x20] sm:$0xff] %v1263
        %1284 = vst [vmem:[%s1278 + $0x28] sm:$0xff] %v1264
        %1285 = vst [vmem:[%s1278 + $0x30] sm:$0xff] %v1265
        %1286 = vst [vmem:[%s1278 + $0x38] sm:$0xff] %v1266
        %1287 = vst [vmem:[%s1278 + $0x40] sm:$0xff] %v1267
        %1288 = vst [vmem:[%s1278 + $0x48] sm:$0xff] %v1268
        %1289 = vst [vmem:[%s1278 + $0x50] sm:$0xff] %v1269
        %1290 = vst [vmem:[%s1278 + $0x58] sm:$0xff] %v1270
        %1291 = vst [vmem:[%s1278 + $0x60] sm:$0xff] %v1271
        %1292 = vst [vmem:[%s1278 + $0x68] sm:$0xff] %v1272
        %1293 = vst [vmem:[%s1278 + $0x70] sm:$0xff] %v1273
        %1294 = vst [vmem:[%s1278 + $0x78] sm:$0xff] %v1274
        // Predicated region
        $region73: #{tpu_custom_call.1} parent=51 // pred_check
          %p1295 = pneg %p358
        $region74: #{tpu_custom_call.1} parent=51 // pred_check_branch
          %1297 = sbr.rel (%p1295) target = $region76
        $region75: #{tpu_custom_call.1} parent=51 // pred_region
          %v1298 = vld [vmem:[%s1] sm:$0xff]
          %s1299 = smul.addr %s1275, 8
          %s1300 = scalar_lea.vmem [#allocation2], %s1299
          %v1301 = vld [vmem:[%s1300] sm:$0xff]
          %v1302 = vld [vmem:[%s1300 + $0x8] sm:$0xff]
          %v1303 = vld [vmem:[%s1300 + $0x10] sm:$0xff]
          %v1304 = vld [vmem:[%s1300 + $0x18] sm:$0xff]
          %v1305 = vld [vmem:[%s1300 + $0x20] sm:$0xff]
          %v1306 = vld [vmem:[%s1300 + $0x28] sm:$0xff]
          %v1307 = vld [vmem:[%s1300 + $0x30] sm:$0xff]
          %v1308 = vld [vmem:[%s1300 + $0x38] sm:$0xff]
          %v1309 = vld [vmem:[%s1300 + $0x40] sm:$0xff]
          %v1310 = vld [vmem:[%s1300 + $0x48] sm:$0xff]
          %v1311 = vld [vmem:[%s1300 + $0x50] sm:$0xff]
          %v1312 = vld [vmem:[%s1300 + $0x58] sm:$0xff]
          %v1313 = vld [vmem:[%s1300 + $0x60] sm:$0xff]
          %v1314 = vld [vmem:[%s1300 + $0x68] sm:$0xff]
          %v1315 = vld [vmem:[%s1300 + $0x70] sm:$0xff]
          %v1316 = vld [vmem:[%s1300 + $0x78] sm:$0xff]
          %v1318 = vunpack.c.l.b16 %v1298
          %v1319 = vunpack.c.h.b16 %v1298
          %v1320 = vpack.c.b16 %v1318, %v1318
          %v1321 = vpack.c.b16 %v1319, %v1319
          %1324 = vmatprep.subr.bf16.mxu0 0
          %1325 = vmatpush1.bf16.msra.mxu0 %v1301
          %1326 = vmatprep.subr.bf16.mxu0 0
          %1327 = vmatpush1.bf16.msra.mxu0 %v1302
          %1328 = vmatprep.subr.bf16.mxu0 0
          %1329 = vmatpush1.bf16.msra.mxu0 %v1303
          %1330 = vmatprep.subr.bf16.mxu0 0
          %1331 = vmatpush1.bf16.msra.mxu0 %v1304
          %1332 = vmatprep.subr.bf16.mxu0 0
          %1333 = vmatpush1.bf16.msra.mxu0 %v1305
          %1334 = vmatprep.subr.bf16.mxu0 0
          %1335 = vmatpush1.bf16.msra.mxu0 %v1306
          %1336 = vmatprep.subr.bf16.mxu0 0
          %1337 = vmatpush1.bf16.msra.mxu0 %v1307
          %1338 = vmatprep.subr.bf16.mxu0 0
          %1339 = vmatpush1.bf16.msra.mxu0 %v1308
          %1340 = vmatprep.subr.bf16.mxu0 0
          %1341 = vmatpush1.bf16.msra.mxu0 %v1309
          %1342 = vmatprep.subr.bf16.mxu0 0
          %1343 = vmatpush1.bf16.msra.mxu0 %v1310
          %1344 = vmatprep.subr.bf16.mxu0 0
          %1345 = vmatpush1.bf16.msra.mxu0 %v1311
          %1346 = vmatprep.subr.bf16.mxu0 0
          %1347 = vmatpush1.bf16.msra.mxu0 %v1312
          %1348 = vmatprep.subr.bf16.mxu0 0
          %1349 = vmatpush1.bf16.msra.mxu0 %v1313
          %1350 = vmatprep.subr.bf16.mxu0 0
          %1351 = vmatpush1.bf16.msra.mxu0 %v1314
          %1352 = vmatprep.subr.bf16.mxu0 0
          %1353 = vmatpush1.bf16.msra.mxu0 %v1315
          %1354 = vmatprep.subr.bf16.mxu0 0
          %1355 = vmatpush1.bf16.msra.mxu0 %v1316
          %1356 = vmatprep.mubr.bf16.mxu0 %v1321
          %1357 = vmatmul.mubr.bf16.gmra.mrb[0].mxu0 %v1320
          %v1358 = vpop.f32.mrb[0].mxu0
          %v1359 = vadd.f32 0.0, %v1358
          %v1360 = vpop.f32.mrb[0].mxu0
          %v1361 = vpop.f32.mrb[0].mxu0
          %v1362 = vpop.f32.mrb[0].mxu0
          %1363 = vdwg.mxu0
          %v1364 = vld [vmem:[%s3] sm:$0xff]
          %1366 = vset.pattern.permute.xlu0 0
          %1367 = vperm.xlu0 %1366, %v1364
          %v1368 = vpop.permute.xlu0 %1367
          %v1370 = vmul.f32 %v1359, %v1368
          %v1371 = vld [vmem:[#allocation9] sm:$0xff]
          %v1372 = vld [vmem:[#allocation9 + $0x8] sm:$0xff]
          %v1373 = vld [vmem:[#allocation9 + $0x10] sm:$0xff]
          %v1374 = vld [vmem:[#allocation9 + $0x18] sm:$0xff]
          %v1375 = vld [vmem:[#allocation9 + $0x20] sm:$0xff]
          %v1376 = vld [vmem:[#allocation9 + $0x28] sm:$0xff]
          %v1377 = vld [vmem:[#allocation9 + $0x30] sm:$0xff]
          %v1378 = vld [vmem:[#allocation9 + $0x38] sm:$0xff]
          %v1379 = vld [vmem:[#allocation9 + $0x40] sm:$0xff]
          %v1380 = vld [vmem:[#allocation9 + $0x48] sm:$0xff]
          %v1381 = vld [vmem:[#allocation9 + $0x50] sm:$0xff]
          %v1382 = vld [vmem:[#allocation9 + $0x58] sm:$0xff]
          %v1383 = vld [vmem:[#allocation9 + $0x60] sm:$0xff]
          %v1384 = vld [vmem:[#allocation9 + $0x68] sm:$0xff]
          %v1385 = vld [vmem:[#allocation9 + $0x70] sm:$0xff]
          %v1386 = vld [vmem:[#allocation9 + $0x78] sm:$0xff]
          %v1387 = vld [vmem:[%s7] sm:$0x1]
          %v1389 = vlaneseq
          %v1390 = vshrl.u32 %v1389, 7
          %v1391 = vsub.s32 0, %v1390
          %v1392 = vrot.slane %v1387, %v1391
          %1394 = vmatprep.subr.mxu0 0.0
          %1395 = vmatpush1.msra.mxu0 %v1371
          %1396 = vmatprep.subr.mxu0 0.0
          %1397 = vmatpush1.msra.mxu0 %v1372
          %1398 = vmatprep.subr.mxu0 0.0
          %1399 = vmatpush1.msra.mxu0 %v1373
          %1400 = vmatprep.subr.mxu0 0.0
          %1401 = vmatpush1.msra.mxu0 %v1374
          %1402 = vmatprep.subr.mxu0 0.0
          %1403 = vmatpush1.msra.mxu0 %v1375
          %1404 = vmatprep.subr.mxu0 0.0
          %1405 = vmatpush1.msra.mxu0 %v1376
          %1406 = vmatprep.subr.mxu0 0.0
          %1407 = vmatpush1.msra.mxu0 %v1377
          %1408 = vmatprep.subr.mxu0 0.0
          %1409 = vmatpush1.msra.mxu0 %v1378
          %1410 = vmatprep.subr.mxu0 0.0
          %1411 = vmatpush1.msra.mxu0 %v1379
          %1412 = vmatprep.subr.mxu0 0.0
          %1413 = vmatpush1.msra.mxu0 %v1380
          %1414 = vmatprep.subr.mxu0 0.0
          %1415 = vmatpush1.msra.mxu0 %v1381
          %1416 = vmatprep.subr.mxu0 0.0
          %1417 = vmatpush1.msra.mxu0 %v1382
          %1418 = vmatprep.subr.mxu0 0.0
          %1419 = vmatpush1.msra.mxu0 %v1383
          %1420 = vmatprep.subr.mxu0 0.0
          %1421 = vmatpush1.msra.mxu0 %v1384
          %1422 = vmatprep.subr.mxu0 0.0
          %1423 = vmatpush1.msra.mxu0 %v1385
          %1424 = vmatprep.subr.mxu0 0.0
          %1425 = vmatpush1.msra.mxu0 %v1386
          %1426 = vmatprep.subr.mxu0 0.0
          %1427 = vmatpush1.msra.mxu0 0.0
          %1428 = vmatprep.subr.mxu0 0.0
          %1429 = vmatpush1.msra.mxu0 0.0
          %1430 = vmatprep.subr.mxu0 0.0
          %1431 = vmatpush1.msra.mxu0 0.0
          %1432 = vmatprep.subr.mxu0 0.0
          %1433 = vmatpush1.msra.mxu0 0.0
          %1434 = vmatprep.subr.mxu0 0.0
          %1435 = vmatpush1.msra.mxu0 0.0
          %1436 = vmatprep.subr.mxu0 0.0
          %1437 = vmatpush1.msra.mxu0 0.0
          %1438 = vmatprep.subr.mxu0 0.0
          %1439 = vmatpush1.msra.mxu0 0.0
          %1440 = vmatprep.subr.mxu0 0.0
          %1441 = vmatpush1.msra.mxu0 0.0
          %1442 = vmatprep.subr.mxu0 0.0
          %1443 = vmatpush1.msra.mxu0 0.0
          %1444 = vmatprep.subr.mxu0 0.0
          %1445 = vmatpush1.msra.mxu0 0.0
          %1446 = vmatprep.subr.mxu0 0.0
          %1447 = vmatpush1.msra.mxu0 0.0
          %1448 = vmatprep.subr.mxu0 0.0
          %1449 = vmatpush1.msra.mxu0 0.0
          %1450 = vmatprep.subr.mxu0 0.0
          %1451 = vmatpush1.msra.mxu0 0.0
          %1452 = vmatprep.subr.mxu0 0.0
          %1453 = vmatpush1.msra.mxu0 0.0
          %1454 = vmatprep.subr.mxu0 0.0
          %1455 = vmatpush1.msra.mxu0 0.0
          %1456 = vmatprep.subr.mxu0 0.0
          %1457 = vmatpush1.msra.mxu0 0.0
          %1458 = vmatprep.mubr.f32.mxu0 0.0
          %1459 = vmatmul.mubr.f32.gmra.mrb[0].mxu0 %v1370
          %v1460 = vpop.f32.mrb[0].mxu0
          %v1461 = vadd.f32 %v1392, %v1460
          %v1462 = vpop.f32.mrb[0].mxu0
          %1463 = vdwg.mxu0
          %1464 = vst [vmem:[%s354] sm:$0xff] %v1461
        $region76: #{tpu_custom_call.1} parent=51 // pred_fallthru
          _
        %s1465 = sand.u32 %s213, 1
        %s1466 = scalar_lea.sflag [#allocation5], %s1465
        %s1467 = sand.u32 %s213, 1
        %s1468 = smul.addr %s1467, 8
        %s1469 = scalar_lea.vmem [#allocation11], %s1468
        // Predicated region
        $region77: #{tpu_custom_call.1} parent=51 // pred_check
          %p1470 = pneg %p223
        $region78: #{tpu_custom_call.1} parent=51 // pred_check_branch
          %1472 = sbr.rel (%p1470) target = $region80
        $region79: #{tpu_custom_call.1} parent=51 // pred_region
          %s1474 = ssub.s32 128, 128
          %1475 = vsyncadd %s1466, %s1474
          %s1476 = smul.addr %s29, 128
          %s1477 = scalar_lea.hbm %s8, %s1476
          %s1479 = sshll.u32 %s1469, 4
          %s1480 = int_to_ptr.vmem [resolvable:$true] %s1479
          %1482 = dma.vmem_to_hbm [thread:$0]  %s1480, 128, %s1477, %s1466
        $region80: #{tpu_custom_call.1} parent=51 // pred_fallthru
          _
      $region52: #{tpu_custom_call.1} parent=5 // pred_fallthru
        _
      %p1483 = scmp.le.s32.totalorder 2, %s20
      // Predicated region
      $region81: #{tpu_custom_call.1} parent=5 // pred_check
        %p1484 = pneg %p1483
      $region82: #{tpu_custom_call.1} parent=5 // pred_check_branch
        %1486 = sbr.rel (%p1484) target = $region84
      $region83: #{tpu_custom_call.1} parent=5 // pred_region
        %s1487 = ssub.s32 %s20, 2
        // Predicated region
        $region85: #{tpu_custom_call.1} parent=83 // pred_check
          %p1488 = pneg %p229
        $region86: #{tpu_custom_call.1} parent=83 // pred_check_branch
          %1490 = sbr.rel (%p1488) target = $region88
        $region87: #{tpu_custom_call.1} parent=83 // pred_region
          %s1491 = sand.u32 %s214, 1
          %s1492 = scalar_lea.sflag [#allocation5], %s1491
          %s1493 = sand.u32 %s214, 1
          %s1494 = smul.addr %s1493, 8
          %s1495 = scalar_lea.vmem [#allocation11], %s1494
          %1496 = dma.done %s1492, 128
        $region88: #{tpu_custom_call.1} parent=83 // pred_fallthru
          _
      $region84: #{tpu_custom_call.1} parent=5 // pred_fallthru
        _
    $region6: #{tpu_custom_call.1} parent=1 // loop_footer
      %s24 = sadd.s32 1, %s20
    $region7: #{tpu_custom_call.1} parent=1 // loop_footer_branch
      %19 = sbr.rel target = $region3
    $region8: #{tpu_custom_call.1} parent=1 // loop_exit
      _
    %1497 = vsyncpa [#allocation4], 1
    %s1498 = scalar_lea.sflag [#allocation4], 1
    %1499 = vsyncpa %s1498, 1
    %1500 = vsyncpa [#allocation7], 1
    %1501 = vsyncpa [#allocation10], 1
    %1502 = vsyncpa [#allocation5], 1
    %s1503 = scalar_lea.sflag [#allocation5], 1
    %1504 = vsyncpa %s1503, 1

</llo_original>
